<compile_context>
chip_gen: v6e
topology: v6e:2x2x1
jax: 0.10.0
libtpu: 0.0.40
codegen_flags: <defaults>
</compile_context>

<pallas_src>
import math
import functools

import jax
import jax.numpy as jnp
from jax.experimental import pallas as pl
from jax.experimental.pallas import tpu as pltpu


# ----------------------------------------------------------------------------
# Fused kernel: grid = (batch, layer).  One invocation = one encoder layer for
# one batch element.  The activation lives in the (revisited) output block
# across the layer axis.
# ----------------------------------------------------------------------------
def fused_encoder_kernel(x_ref, srcmask_ref, pad_ref,
                         wqkv_ref, bqkv_ref, wo_ref, bo_ref,
                         w1_ref, b1_ref, w2_ref, b2_ref,
                         ln1w_ref, ln1b_ref, ln2w_ref, ln2b_ref,
                         out_ref, *, nhead, eps=1e-5):
    layer = pl.program_id(1)

    # Load the embedded input into the resident output buffer at layer 0; for
    # later layers the buffer already holds the previous layer's output.
    @pl.when(layer == 0)
    def _():
        out_ref[0] = x_ref[0]

    x = out_ref[0]                            # (S, E) f32 activation
    S, E = x.shape
    hd = E // nhead
    scale = 1.0 / math.sqrt(hd)

    # Additive attention mask rebuilt in-kernel: (S,S) src_mask + (1,S) padding.
    mask = srcmask_ref[...] + pad_ref[0]      # (S, S) f32

    # ---- fused QKV projection (bf16 MXU, f32 accumulate) --------------------
    x_bf = x.astype(jnp.bfloat16)
    qkv = jnp.dot(x_bf, wqkv_ref[0], preferred_element_type=jnp.float32)
    qkv = qkv + bqkv_ref[0]                   # (S, 3E) f32

    q = jnp.swapaxes(qkv[:, :E].reshape(S, nhead, hd), 0, 1) * scale   # (h,S,hd)
    k = jnp.swapaxes(qkv[:, E:2 * E].reshape(S, nhead, hd), 0, 1)      # (h,S,hd)
    v = jnp.swapaxes(qkv[:, 2 * E:].reshape(S, nhead, hd), 0, 1)       # (h,S,hd)

    # ---- all heads in one batched MXU contraction ---------------------------
    s = jnp.einsum('hqd,hkd->hqk',
                   q.astype(jnp.bfloat16), k.astype(jnp.bfloat16),
                   preferred_element_type=jnp.float32)                 # (h,S,S)
    s = s + mask[None]
    s = s - jnp.max(s, axis=-1, keepdims=True)
    p = jnp.exp(s)
    p = p * pl.reciprocal(jnp.sum(p, axis=-1, keepdims=True), approx=True)

    attn_h = jnp.einsum('hqk,hkd->hqd',
                        p.astype(jnp.bfloat16), v.astype(jnp.bfloat16),
                        preferred_element_type=jnp.float32)            # (h,S,hd)
    attn = jnp.swapaxes(attn_h, 0, 1).reshape(S, E)                    # (S, E)
    attn = jnp.dot(attn.astype(jnp.bfloat16), wo_ref[0],
                   preferred_element_type=jnp.float32) + bo_ref[0]

    def layer_norm(y, w, b):
        mu = jnp.mean(y, axis=-1, keepdims=True)
        var = jnp.mean((y - mu) ** 2, axis=-1, keepdims=True)
        return (y - mu) * jax.lax.rsqrt(var + eps) * w + b

    # ---- post-norm residual blocks (PyTorch default norm_first=False) -------
    x1 = layer_norm(x + attn, ln1w_ref[0], ln1b_ref[0])
    h1 = jnp.maximum(
        jnp.dot(x1.astype(jnp.bfloat16), w1_ref[0],
                preferred_element_type=jnp.float32) + b1_ref[0], 0.0)
    ff = jnp.dot(h1.astype(jnp.bfloat16), w2_ref[0],
                 preferred_element_type=jnp.float32) + b2_ref[0]
    x2 = layer_norm(x1 + ff, ln2w_ref[0], ln2b_ref[0])

    out_ref[0] = x2


def run_encoder_stack(x_bse, src_mask_ss, pad_add_b1s, params):
    """x_bse: (B,S,E) f32; src_mask_ss: (S,S) f32 additive; pad_add_b1s: (B,1,S)."""
    B, S, E = x_bse.shape
    L = params["wqkv"].shape[0]
    FF = params["w1"].shape[2]
    nhead = params["nhead"]

    in_specs = [
        pl.BlockSpec((1, S, E), lambda b, l: (b, 0, 0)),        # x (read at layer 0)
        pl.BlockSpec((S, S), lambda b, l: (0, 0)),              # src_mask (shared)
        pl.BlockSpec((1, 1, S), lambda b, l: (b, 0, 0)),        # padding row
        pl.BlockSpec((1, E, 3 * E), lambda b, l: (l, 0, 0)),    # wqkv
        pl.BlockSpec((1, 1, 3 * E), lambda b, l: (l, 0, 0)),    # bqkv
        pl.BlockSpec((1, E, E), lambda b, l: (l, 0, 0)),        # wo
        pl.BlockSpec((1, 1, E), lambda b, l: (l, 0, 0)),        # bo
        pl.BlockSpec((1, E, FF), lambda b, l: (l, 0, 0)),       # w1
        pl.BlockSpec((1, 1, FF), lambda b, l: (l, 0, 0)),       # b1
        pl.BlockSpec((1, FF, E), lambda b, l: (l, 0, 0)),       # w2
        pl.BlockSpec((1, 1, E), lambda b, l: (l, 0, 0)),        # b2
        pl.BlockSpec((1, 1, E), lambda b, l: (l, 0, 0)),        # ln1w
        pl.BlockSpec((1, 1, E), lambda b, l: (l, 0, 0)),        # ln1b
        pl.BlockSpec((1, 1, E), lambda b, l: (l, 0, 0)),        # ln2w
        pl.BlockSpec((1, 1, E), lambda b, l: (l, 0, 0)),        # ln2b
    ]
    # Output block index is constant along the layer axis -> activation stays
    # resident in VMEM across layers, written back to HBM only per batch element.
    out_spec = pl.BlockSpec((1, S, E), lambda b, l: (b, 0, 0))

    kernel = functools.partial(fused_encoder_kernel, nhead=nhead)
    return pl.pallas_call(
        kernel,
        out_shape=jax.ShapeDtypeStruct((B, S, E), jnp.float32),
        grid_spec=pltpu.PrefetchScalarGridSpec(
            num_scalar_prefetch=0,
            grid=(B, L),
            in_specs=in_specs,
            out_specs=out_spec,
        ),
        compiler_params=pltpu.CompilerParams(
            dimension_semantics=("parallel", "arbitrary")),
    )(x_bse, src_mask_ss, pad_add_b1s,
      params["wqkv"], params["bqkv"], params["wo"], params["bo"],
      params["w1"], params["b1"], params["w2"], params["b2"],
      params["ln1w"], params["ln1b"], params["ln2w"], params["ln2b"])


# ----------------------------------------------------------------------------
# Plain-JAX glue: embedding lookup, positional encoding, mask pieces.
# ----------------------------------------------------------------------------
def make_positional_encoding(max_len, d_model):
    position = jnp.arange(max_len, dtype=jnp.float32)[:, None]
    div_term = jnp.exp(jnp.arange(0, d_model, 2, dtype=jnp.float32)
                       * (-(math.log(10000.0) / d_model)))
    pe = jnp.zeros((max_len, d_model), dtype=jnp.float32)
    pe = pe.at[:, 0::2].set(jnp.sin(position * div_term))
    pe = pe.at[:, 1::2].set(jnp.cos(position * div_term))
    return pe  # (max_len, d_model)


def transformer_encoder_forward(src, src_mask, src_padding_mask, params):
    """src: (S, B) int32; src_mask: (S, S) float additive; src_padding_mask:
    (B, S) bool (True = pad).  Returns (S, B, E) f32, matching PyTorch layout."""
    emb_size = params["embedding"].shape[1]
    S, B = src.shape

    # embedding * sqrt(E) + positional encoding  (dropout = identity / eval)
    src_emb = jnp.take(params["embedding"], src, axis=0) * math.sqrt(emb_size)  # (S,B,E)
    src_emb = src_emb + params["pe"][:S][:, None, :]

    x = jnp.transpose(src_emb, (1, 0, 2)).astype(jnp.float32)                   # (B,S,E)

    # mask pieces only -- the (B,S,S) additive mask is rebuilt inside the kernel
    pad_add = jnp.where(src_padding_mask, -1e9, 0.0).astype(jnp.float32)[:, None, :]  # (B,1,S)
    src_mask_f = src_mask.astype(jnp.float32)                                         # (S,S)

    out = run_encoder_stack(x, src_mask_f, pad_add, params)                     # (B,S,E)
    return jnp.transpose(out, (1, 0, 2))                                        # (S,B,E)


def init_params(key, vocab_size, emb_size, nhead, num_layers, dim_feedforward):
    """Weights are stored kernel-oriented ((in, out) layout, bf16) and stacked
    over layers.  Loading a PyTorch state_dict would require one transpose per
    projection weight (done once, outside the kernel)."""
    keys = jax.random.split(key, 1 + num_layers * 6)
    E, FF = emb_size, dim_feedforward

    layers = []
    ki = 1
    for _ in range(num_layers):
        k_qkv, k_o, k_1, k_2, kb1, kb2 = keys[ki:ki + 6]
        ki += 6
        layers.append({
            "wqkv": (0.05 * jax.random.normal(k_qkv, (E, 3 * E), jnp.float32)
                     ).astype(jnp.bfloat16),
            "bqkv": jnp.zeros((1, 3 * E), jnp.float32),
            "wo":   (0.05 * jax.random.normal(k_o, (E, E), jnp.float32)
                     ).astype(jnp.bfloat16),
            "bo":   jnp.zeros((1, E), jnp.float32),
            "w1":   (0.05 * jax.random.normal(k_1, (E, FF), jnp.float32)
                     ).astype(jnp.bfloat16),
            "b1":   0.01 * jax.random.normal(kb1, (1, FF), jnp.float32),
            "w2":   (0.05 * jax.random.normal(k_2, (FF, E), jnp.float32)
                     ).astype(jnp.bfloat16),
            "b2":   0.01 * jax.random.normal(kb2, (1, E), jnp.float32),
            "ln1w": jnp.ones((1, E), jnp.float32),
            "ln1b": jnp.zeros((1, E), jnp.float32),
            "ln2w": jnp.ones((1, E), jnp.float32),
            "ln2b": jnp.zeros((1, E), jnp.float32),
        })

    def stack(name):
        return jnp.stack([lp[name] for lp in layers], axis=0)

    params = {
        "embedding": jax.random.normal(keys[0], (vocab_size, E), jnp.float32),
        "pe": make_positional_encoding(5000, E),
        "nhead": nhead,
    }
    for name in ["wqkv", "bqkv", "wo", "bo", "w1", "b1", "w2", "b2",
                 "ln1w", "ln1b", "ln2w", "ln2b"]:
        params[name] = stack(name)
    return params


if __name__ == "__main__":
    # small config consistent with the module
    VOCAB, EMB, NHEAD, LAYERS, FF = 50, 32, 4, 2, 64
    S, B = 8, 2

    key = jax.random.PRNGKey(0)
    k_tok, k_par = jax.random.split(key)

    params = init_params(k_par, VOCAB, EMB, NHEAD, LAYERS, FF)

    src = jax.random.randint(k_tok, (S, B), 0, VOCAB, dtype=jnp.int32)          # (S, B)

    # causal src_mask (like generate_square_subsequent_mask), additive float
    src_mask = jnp.where(jnp.triu(jnp.ones((S, S), jnp.bool_), k=1), -1e9, 0.0)

    # padding mask: last two positions of batch element 1 are padding
    src_padding_mask = jnp.zeros((B, S), jnp.bool_).at[1, S - 2:].set(True)

    out = transformer_encoder_forward(src, src_mask, src_padding_mask, params)
    out = jax.block_until_ready(out)
    assert out.shape == (S, B, EMB)
    assert bool(jnp.all(jnp.isfinite(out)))
    print("KERNEL_OK")
</pallas_src>

<mosaic_0001>
module attributes {stable_mosaic.version = 11 : i64} {
  func.func @fused_encoder_kernel(%arg0: i32, %arg1: i32, %arg2: memref<1x8x32xf32, #tpu.memory_space<vmem>>, %arg3: memref<8x8xf32, #tpu.memory_space<vmem>>, %arg4: memref<1x1x8xf32, #tpu.memory_space<vmem>>, %arg5: memref<1x32x96xbf16, #tpu.memory_space<vmem>>, %arg6: memref<1x1x96xf32, #tpu.memory_space<vmem>>, %arg7: memref<1x32x32xbf16, #tpu.memory_space<vmem>>, %arg8: memref<1x1x32xf32, #tpu.memory_space<vmem>>, %arg9: memref<1x32x64xbf16, #tpu.memory_space<vmem>>, %arg10: memref<1x1x64xf32, #tpu.memory_space<vmem>>, %arg11: memref<1x64x32xbf16, #tpu.memory_space<vmem>>, %arg12: memref<1x1x32xf32, #tpu.memory_space<vmem>>, %arg13: memref<1x1x32xf32, #tpu.memory_space<vmem>>, %arg14: memref<1x1x32xf32, #tpu.memory_space<vmem>>, %arg15: memref<1x1x32xf32, #tpu.memory_space<vmem>>, %arg16: memref<1x1x32xf32, #tpu.memory_space<vmem>>, %arg17: memref<1x8x32xf32, #tpu.memory_space<vmem>>) attributes {dimension_semantics = [#tpu.dimension_semantics<parallel>, #tpu.dimension_semantics<arbitrary>], iteration_bounds = array<i64: 2, 2>, scalar_prefetch = 0 : i64, scratch_operands = 0 : i64, tpu.core_type = #tpu.core_type<tc>, window_params = [{transform_indices = @transform_0, window_bounds = array<i64: 1, 8, 32>}, {pipeline_mode = #tpu.pipeline_mode<synchronous>, transform_indices = @transform_1, window_bounds = array<i64: 8, 8>}, {transform_indices = @transform_2, window_bounds = array<i64: 1, 1, 8>}, {transform_indices = @transform_3, window_bounds = array<i64: 1, 32, 96>}, {transform_indices = @transform_4, window_bounds = array<i64: 1, 1, 96>}, {transform_indices = @transform_5, window_bounds = array<i64: 1, 32, 32>}, {transform_indices = @transform_6, window_bounds = array<i64: 1, 1, 32>}, {transform_indices = @transform_7, window_bounds = array<i64: 1, 32, 64>}, {transform_indices = @transform_8, window_bounds = array<i64: 1, 1, 64>}, {transform_indices = @transform_9, window_bounds = array<i64: 1, 64, 32>}, {transform_indices = @transform_10, window_bounds = array<i64: 1, 1, 32>}, {transform_indices = @transform_11, window_bounds = array<i64: 1, 1, 32>}, {transform_indices = @transform_12, window_bounds = array<i64: 1, 1, 32>}, {transform_indices = @transform_13, window_bounds = array<i64: 1, 1, 32>}, {transform_indices = @transform_14, window_bounds = array<i64: 1, 1, 32>}, {transform_indices = @transform_15, window_bounds = array<i64: 1, 8, 32>}]} {
    %c0_i32 = arith.constant 0 : i32
    %0 = arith.cmpi eq, %arg1, %c0_i32 : i32
    %1 = arith.extui %0 : i1 to i32
    %c0_i32_0 = arith.constant 0 : i32
    %2 = arith.cmpi ne, %1, %c0_i32_0 : i32
    scf.if %2 {
      %c0_66 = arith.constant 0 : index
      %c0_67 = arith.constant 0 : index
      %c0_68 = arith.constant 0 : index
      %133 = vector.load %arg2[%c0_66, %c0_67, %c0_68] : memref<1x8x32xf32, #tpu.memory_space<vmem>>, vector<1x8x32xf32>
      %134 = vector.shape_cast %133 : vector<1x8x32xf32> to vector<8x32xf32>
      %c0_69 = arith.constant 0 : index
      %c0_70 = arith.constant 0 : index
      %c0_71 = arith.constant 0 : index
      %135 = vector.load %arg17[%c0_69, %c0_70, %c0_71] : memref<1x8x32xf32, #tpu.memory_space<vmem>>, vector<1x8x32xf32>
      %136 = vector.shape_cast %135 : vector<1x8x32xf32> to vector<8x32xf32>
      %137 = vector.shape_cast %134 : vector<8x32xf32> to vector<1x8x32xf32>
      tpu.vector_store %arg17[%c0_69, %c0_70, %c0_71], %137 {strides = array<i32>} : memref<1x8x32xf32, #tpu.memory_space<vmem>>, vector<1x8x32xf32>,
    } else {
    }
    %c0 = arith.constant 0 : index
    %c0_1 = arith.constant 0 : index
    %c0_2 = arith.constant 0 : index
    %3 = vector.load %arg17[%c0, %c0_1, %c0_2] : memref<1x8x32xf32, #tpu.memory_space<vmem>>, vector<1x8x32xf32>
    %4 = vector.shape_cast %3 : vector<1x8x32xf32> to vector<8x32xf32>
    %c0_3 = arith.constant 0 : index
    %c0_4 = arith.constant 0 : index
    %5 = vector.load %arg3[%c0_3, %c0_4] : memref<8x8xf32, #tpu.memory_space<vmem>>, vector<8x8xf32>
    %c0_5 = arith.constant 0 : index
    %c0_6 = arith.constant 0 : index
    %c0_7 = arith.constant 0 : index
    %6 = vector.load %arg4[%c0_5, %c0_6, %c0_7] : memref<1x1x8xf32, #tpu.memory_space<vmem>>, vector<1x1x8xf32>
    %7 = vector.shape_cast %6 : vector<1x1x8xf32> to vector<1x8xf32>
    %8 = vector.broadcast %7 : vector<1x8xf32> to vector<8x8xf32>
    %9 = arith.addf %5, %8 : vector<8x8xf32>
    %10 = arith.truncf %4 : vector<8x32xf32> to vector<8x32xbf16>
    %c0_8 = arith.constant 0 : index
    %c0_9 = arith.constant 0 : index
    %c0_10 = arith.constant 0 : index
    %11 = vector.load %arg5[%c0_8, %c0_9, %c0_10] : memref<1x32x96xbf16, #tpu.memory_space<vmem>>, vector<1x32x96xbf16>
    %12 = vector.shape_cast %11 : vector<1x32x96xbf16> to vector<32x96xbf16>
    %cst = arith.constant dense<0.000000e+00> : vector<8x96xf32>
    %13 = tpu.matmul %10, %12, %cst {dimension_numbers = #tpu.dot_dimension_numbers<[1], [0], [0], [1], [0, 0, 1, 1], [], []>} : vector<8x32xbf16>, vector<32x96xbf16>, vector<8x96xf32> -> vector<8x96xf32>
    %c0_11 = arith.constant 0 : index
    %c0_12 = arith.constant 0 : index
    %c0_13 = arith.constant 0 : index
    %14 = vector.load %arg6[%c0_11, %c0_12, %c0_13] : memref<1x1x96xf32, #tpu.memory_space<vmem>>, vector<1x1x96xf32>
    %15 = vector.shape_cast %14 : vector<1x1x96xf32> to vector<1x96xf32>
    %16 = vector.broadcast %15 : vector<1x96xf32> to vector<8x96xf32>
    %17 = arith.addf %13, %16 : vector<8x96xf32>
    %18 = vector.extract_strided_slice %17 {offsets = [0, 0], sizes = [8, 32], strides = [1, 1]} : vector<8x96xf32> to vector<8x32xf32>
    %19 = vector.shape_cast %18 : vector<8x32xf32> to vector<8x4x8xf32>
    %20 = tpu.transpose %19, [1, 0, 2] : vector<8x4x8xf32> -> vector<4x8x8xf32>
    %cst_14 = arith.constant 0.353553385 : f32
    %21 = vector.broadcast %cst_14 : f32 to vector<4x8x8xf32>
    %22 = arith.mulf %20, %21 : vector<4x8x8xf32>
    %23 = vector.extract_strided_slice %17 {offsets = [0, 32], sizes = [8, 32], strides = [1, 1]} : vector<8x96xf32> to vector<8x32xf32>
    %24 = vector.shape_cast %23 : vector<8x32xf32> to vector<8x4x8xf32>
    %25 = tpu.transpose %24, [1, 0, 2] : vector<8x4x8xf32> -> vector<4x8x8xf32>
    %26 = vector.extract_strided_slice %17 {offsets = [0, 64], sizes = [8, 32], strides = [1, 1]} : vector<8x96xf32> to vector<8x32xf32>
    %27 = vector.shape_cast %26 : vector<8x32xf32> to vector<8x4x8xf32>
    %28 = tpu.transpose %27, [1, 0, 2] : vector<8x4x8xf32> -> vector<4x8x8xf32>
    %29 = arith.truncf %22 : vector<4x8x8xf32> to vector<4x8x8xbf16>
    %30 = arith.truncf %25 : vector<4x8x8xf32> to vector<4x8x8xbf16>
    "tpu.trace_start"() <{level = 10 : i32, message = "hqd,hkd->hqk"}> : () -> ()
    %cst_15 = arith.constant dense<0.000000e+00> : vector<4x8x8xf32>
    %31 = tpu.matmul %29, %30, %cst_15 {dimension_numbers = #tpu.dot_dimension_numbers<[2], [2], [1], [1], [0, 0, 0, 1, 1, 1], [0], [0]>} : vector<4x8x8xbf16>, vector<4x8x8xbf16>, vector<4x8x8xf32> -> vector<4x8x8xf32>
    "tpu.trace_stop"() : () -> ()
    %32 = vector.shape_cast %9 : vector<8x8xf32> to vector<1x8x8xf32>
    %33 = vector.broadcast %32 : vector<1x8x8xf32> to vector<4x8x8xf32>
    %34 = arith.addf %31, %33 : vector<4x8x8xf32>
    %cst_16 = arith.constant dense<0xFF800000> : vector<4x8xf32>
    %35 = vector.multi_reduction <maximumf>, %34, %cst_16 [2] : vector<4x8x8xf32> to vector<4x8xf32>
    %36 = vector.shape_cast %35 : vector<4x8xf32> to vector<4x8x1xf32>
    %37 = vector.broadcast %36 : vector<4x8x1xf32> to vector<4x8x8xf32>
    %38 = arith.subf %34, %37 : vector<4x8x8xf32>
    %39 = math.exp %38 : vector<4x8x8xf32>
    %cst_17 = arith.constant dense<0.000000e+00> : vector<4x8xf32>
    %40 = vector.multi_reduction <add>, %39, %cst_17 [2] : vector<4x8x8xf32> to vector<4x8xf32>
    %41 = vector.shape_cast %40 : vector<4x8xf32> to vector<4x8x1xf32>
    %42 = tpu.reciprocal %41 {approx = true} : vector<4x8x1xf32> -> vector<4x8x1xf32>
    %43 = vector.broadcast %42 : vector<4x8x1xf32> to vector<4x8x8xf32>
    %44 = arith.mulf %39, %43 : vector<4x8x8xf32>
    %45 = arith.truncf %44 : vector<4x8x8xf32> to vector<4x8x8xbf16>
    %46 = arith.truncf %28 : vector<4x8x8xf32> to vector<4x8x8xbf16>
    "tpu.trace_start"() <{level = 10 : i32, message = "hqk,hkd->hqd"}> : () -> ()
    %cst_18 = arith.constant dense<0.000000e+00> : vector<4x8x8xf32>
    %47 = tpu.matmul %45, %46, %cst_18 {dimension_numbers = #tpu.dot_dimension_numbers<[2], [1], [1], [2], [0, 0, 0, 1, 1, 2], [0], [0]>} : vector<4x8x8xbf16>, vector<4x8x8xbf16>, vector<4x8x8xf32> -> vector<4x8x8xf32>
    "tpu.trace_stop"() : () -> ()
    %48 = tpu.transpose %47, [1, 0, 2] : vector<4x8x8xf32> -> vector<8x4x8xf32>
    %49 = vector.shape_cast %48 : vector<8x4x8xf32> to vector<8x32xf32>
    %50 = arith.truncf %49 : vector<8x32xf32> to vector<8x32xbf16>
    %c0_19 = arith.constant 0 : index
    %c0_20 = arith.constant 0 : index
    %c0_21 = arith.constant 0 : index
    %51 = vector.load %arg7[%c0_19, %c0_20, %c0_21] : memref<1x32x32xbf16, #tpu.memory_space<vmem>>, vector<1x32x32xbf16>
    %52 = vector.shape_cast %51 : vector<1x32x32xbf16> to vector<32x32xbf16>
    %cst_22 = arith.constant dense<0.000000e+00> : vector<8x32xf32>
    %53 = tpu.matmul %50, %52, %cst_22 {dimension_numbers = #tpu.dot_dimension_numbers<[1], [0], [0], [1], [0, 0, 1, 1], [], []>} : vector<8x32xbf16>, vector<32x32xbf16>, vector<8x32xf32> -> vector<8x32xf32>
    %c0_23 = arith.constant 0 : index
    %c0_24 = arith.constant 0 : index
    %c0_25 = arith.constant 0 : index
    %54 = vector.load %arg8[%c0_23, %c0_24, %c0_25] : memref<1x1x32xf32, #tpu.memory_space<vmem>>, vector<1x1x32xf32>
    %55 = vector.shape_cast %54 : vector<1x1x32xf32> to vector<1x32xf32>
    %56 = vector.broadcast %55 : vector<1x32xf32> to vector<8x32xf32>
    %57 = arith.addf %53, %56 : vector<8x32xf32>
    %58 = arith.addf %4, %57 : vector<8x32xf32>
    %c0_26 = arith.constant 0 : index
    %c0_27 = arith.constant 0 : index
    %c0_28 = arith.constant 0 : index
    %59 = vector.load %arg13[%c0_26, %c0_27, %c0_28] : memref<1x1x32xf32, #tpu.memory_space<vmem>>, vector<1x1x32xf32>
    %60 = vector.shape_cast %59 : vector<1x1x32xf32> to vector<1x32xf32>
    %c0_29 = arith.constant 0 : index
    %c0_30 = arith.constant 0 : index
    %c0_31 = arith.constant 0 : index
    %61 = vector.load %arg14[%c0_29, %c0_30, %c0_31] : memref<1x1x32xf32, #tpu.memory_space<vmem>>, vector<1x1x32xf32>
    %62 = vector.shape_cast %61 : vector<1x1x32xf32> to vector<1x32xf32>
    %cst_32 = arith.constant dense<0.000000e+00> : vector<8xf32>
    %63 = vector.multi_reduction <add>, %58, %cst_32 [1] : vector<8x32xf32> to vector<8xf32>
    %64 = vector.shape_cast %63 : vector<8xf32> to vector<8x1xf32>
    %cst_33 = arith.constant 3.200000e+01 : f32
    %65 = vector.broadcast %cst_33 : f32 to vector<8x1xf32>
    %66 = arith.divf %64, %65 : vector<8x1xf32>
    %67 = vector.broadcast %66 : vector<8x1xf32> to vector<8x32xf32>
    %68 = arith.subf %58, %67 : vector<8x32xf32>
    %69 = arith.mulf %68, %68 : vector<8x32xf32>
    %cst_34 = arith.constant dense<0.000000e+00> : vector<8xf32>
    %70 = vector.multi_reduction <add>, %69, %cst_34 [1] : vector<8x32xf32> to vector<8xf32>
    %71 = vector.shape_cast %70 : vector<8xf32> to vector<8x1xf32>
    %cst_35 = arith.constant 3.200000e+01 : f32
    %72 = vector.broadcast %cst_35 : f32 to vector<8x1xf32>
    %73 = arith.divf %71, %72 : vector<8x1xf32>
    %74 = vector.broadcast %66 : vector<8x1xf32> to vector<8x32xf32>
    %75 = arith.subf %58, %74 : vector<8x32xf32>
    %cst_36 = arith.constant 9.99999974E-6 : f32
    %76 = vector.broadcast %cst_36 : f32 to vector<8x1xf32>
    %77 = arith.addf %73, %76 : vector<8x1xf32>
    %78 = math.rsqrt %77 : vector<8x1xf32>
    %79 = vector.broadcast %78 : vector<8x1xf32> to vector<8x32xf32>
    %80 = arith.mulf %75, %79 : vector<8x32xf32>
    %81 = vector.broadcast %60 : vector<1x32xf32> to vector<8x32xf32>
    %82 = arith.mulf %80, %81 : vector<8x32xf32>
    %83 = vector.broadcast %62 : vector<1x32xf32> to vector<8x32xf32>
    %84 = arith.addf %82, %83 : vector<8x32xf32>
    %85 = arith.truncf %84 : vector<8x32xf32> to vector<8x32xbf16>
    %c0_37 = arith.constant 0 : index
    %c0_38 = arith.constant 0 : index
    %c0_39 = arith.constant 0 : index
    %86 = vector.load %arg9[%c0_37, %c0_38, %c0_39] : memref<1x32x64xbf16, #tpu.memory_space<vmem>>, vector<1x32x64xbf16>
    %87 = vector.shape_cast %86 : vector<1x32x64xbf16> to vector<32x64xbf16>
    %cst_40 = arith.constant dense<0.000000e+00> : vector<8x64xf32>
    %88 = tpu.matmul %85, %87, %cst_40 {dimension_numbers = #tpu.dot_dimension_numbers<[1], [0], [0], [1], [0, 0, 1, 1], [], []>} : vector<8x32xbf16>, vector<32x64xbf16>, vector<8x64xf32> -> vector<8x64xf32>
    %c0_41 = arith.constant 0 : index
    %c0_42 = arith.constant 0 : index
    %c0_43 = arith.constant 0 : index
    %89 = vector.load %arg10[%c0_41, %c0_42, %c0_43] : memref<1x1x64xf32, #tpu.memory_space<vmem>>, vector<1x1x64xf32>
    %90 = vector.shape_cast %89 : vector<1x1x64xf32> to vector<1x64xf32>
    %91 = vector.broadcast %90 : vector<1x64xf32> to vector<8x64xf32>
    %92 = arith.addf %88, %91 : vector<8x64xf32>
    %cst_44 = arith.constant 0.000000e+00 : f32
    %93 = vector.broadcast %cst_44 : f32 to vector<8x64xf32>
    %94 = arith.maximumf %92, %93 : vector<8x64xf32>
    %95 = arith.truncf %94 : vector<8x64xf32> to vector<8x64xbf16>
    %c0_45 = arith.constant 0 : index
    %c0_46 = arith.constant 0 : index
    %c0_47 = arith.constant 0 : index
    %96 = vector.load %arg11[%c0_45, %c0_46, %c0_47] : memref<1x64x32xbf16, #tpu.memory_space<vmem>>, vector<1x64x32xbf16>
    %97 = vector.shape_cast %96 : vector<1x64x32xbf16> to vector<64x32xbf16>
    %cst_48 = arith.constant dense<0.000000e+00> : vector<8x32xf32>
    %98 = tpu.matmul %95, %97, %cst_48 {dimension_numbers = #tpu.dot_dimension_numbers<[1], [0], [0], [1], [0, 0, 1, 1], [], []>} : vector<8x64xbf16>, vector<64x32xbf16>, vector<8x32xf32> -> vector<8x32xf32>
    %c0_49 = arith.constant 0 : index
    %c0_50 = arith.constant 0 : index
    %c0_51 = arith.constant 0 : index
    %99 = vector.load %arg12[%c0_49, %c0_50, %c0_51] : memref<1x1x32xf32, #tpu.memory_space<vmem>>, vector<1x1x32xf32>
    %100 = vector.shape_cast %99 : vector<1x1x32xf32> to vector<1x32xf32>
    %101 = vector.broadcast %100 : vector<1x32xf32> to vector<8x32xf32>
    %102 = arith.addf %98, %101 : vector<8x32xf32>
    %103 = arith.addf %84, %102 : vector<8x32xf32>
    %c0_52 = arith.constant 0 : index
    %c0_53 = arith.constant 0 : index
    %c0_54 = arith.constant 0 : index
    %104 = vector.load %arg15[%c0_52, %c0_53, %c0_54] : memref<1x1x32xf32, #tpu.memory_space<vmem>>, vector<1x1x32xf32>
    %105 = vector.shape_cast %104 : vector<1x1x32xf32> to vector<1x32xf32>
    %c0_55 = arith.constant 0 : index
    %c0_56 = arith.constant 0 : index
    %c0_57 = arith.constant 0 : index
    %106 = vector.load %arg16[%c0_55, %c0_56, %c0_57] : memref<1x1x32xf32, #tpu.memory_space<vmem>>, vector<1x1x32xf32>
    %107 = vector.shape_cast %106 : vector<1x1x32xf32> to vector<1x32xf32>
    %cst_58 = arith.constant dense<0.000000e+00> : vector<8xf32>
    %108 = vector.multi_reduction <add>, %103, %cst_58 [1] : vector<8x32xf32> to vector<8xf32>
    %109 = vector.shape_cast %108 : vector<8xf32> to vector<8x1xf32>
    %cst_59 = arith.constant 3.200000e+01 : f32
    %110 = vector.broadcast %cst_59 : f32 to vector<8x1xf32>
    %111 = arith.divf %109, %110 : vector<8x1xf32>
    %112 = vector.broadcast %111 : vector<8x1xf32> to vector<8x32xf32>
    %113 = arith.subf %103, %112 : vector<8x32xf32>
    %114 = arith.mulf %113, %113 : vector<8x32xf32>
    %cst_60 = arith.constant dense<0.000000e+00> : vector<8xf32>
    %115 = vector.multi_reduction <add>, %114, %cst_60 [1] : vector<8x32xf32> to vector<8xf32>
    %116 = vector.shape_cast %115 : vector<8xf32> to vector<8x1xf32>
    %cst_61 = arith.constant 3.200000e+01 : f32
    %117 = vector.broadcast %cst_61 : f32 to vector<8x1xf32>
    %118 = arith.divf %116, %117 : vector<8x1xf32>
    %119 = vector.broadcast %111 : vector<8x1xf32> to vector<8x32xf32>
    %120 = arith.subf %103, %119 : vector<8x32xf32>
    %cst_62 = arith.constant 9.99999974E-6 : f32
    %121 = vector.broadcast %cst_62 : f32 to vector<8x1xf32>
    %122 = arith.addf %118, %121 : vector<8x1xf32>
    %123 = math.rsqrt %122 : vector<8x1xf32>
    %124 = vector.broadcast %123 : vector<8x1xf32> to vector<8x32xf32>
    %125 = arith.mulf %120, %124 : vector<8x32xf32>
    %126 = vector.broadcast %105 : vector<1x32xf32> to vector<8x32xf32>
    %127 = arith.mulf %125, %126 : vector<8x32xf32>
    %128 = vector.broadcast %107 : vector<1x32xf32> to vector<8x32xf32>
    %129 = arith.addf %127, %128 : vector<8x32xf32>
    %c0_63 = arith.constant 0 : index
    %c0_64 = arith.constant 0 : index
    %c0_65 = arith.constant 0 : index
    %130 = vector.load %arg17[%c0_63, %c0_64, %c0_65] : memref<1x8x32xf32, #tpu.memory_space<vmem>>, vector<1x8x32xf32>
    %131 = vector.shape_cast %130 : vector<1x8x32xf32> to vector<8x32xf32>
    %132 = vector.shape_cast %129 : vector<8x32xf32> to vector<1x8x32xf32>
    tpu.vector_store %arg17[%c0_63, %c0_64, %c0_65], %132 {strides = array<i32>} : memref<1x8x32xf32, #tpu.memory_space<vmem>>, vector<1x8x32xf32>,
    return
  }
  func.func @transform_0(%arg0: i32, %arg1: i32) -> (i32, i32, i32) {
    %c0_i32 = arith.constant 0 : i32
    %c0_i32_0 = arith.constant 0 : i32
    %c0_i32_1 = arith.constant 0 : i32
    return %arg0, %c0_i32, %c0_i32_0 : i32, i32, i32
  }
  func.func @transform_1(%arg0: i32, %arg1: i32) -> (i32, i32) {
    %c0_i32 = arith.constant 0 : i32
    %c0_i32_0 = arith.constant 0 : i32
    %c0_i32_1 = arith.constant 0 : i32
    return %c0_i32, %c0_i32_0 : i32, i32
  }
  func.func @transform_2(%arg0: i32, %arg1: i32) -> (i32, i32, i32) {
    %c0_i32 = arith.constant 0 : i32
    %c0_i32_0 = arith.constant 0 : i32
    %c0_i32_1 = arith.constant 0 : i32
    return %arg0, %c0_i32, %c0_i32_0 : i32, i32, i32
  }
  func.func @transform_3(%arg0: i32, %arg1: i32) -> (i32, i32, i32) {
    %c0_i32 = arith.constant 0 : i32
    %c0_i32_0 = arith.constant 0 : i32
    %c0_i32_1 = arith.constant 0 : i32
    return %arg1, %c0_i32, %c0_i32_0 : i32, i32, i32
  }
  func.func @transform_4(%arg0: i32, %arg1: i32) -> (i32, i32, i32) {
    %c0_i32 = arith.constant 0 : i32
    %c0_i32_0 = arith.constant 0 : i32
    %c0_i32_1 = arith.constant 0 : i32
    return %arg1, %c0_i32, %c0_i32_0 : i32, i32, i32
  }
  func.func @transform_5(%arg0: i32, %arg1: i32) -> (i32, i32, i32) {
    %c0_i32 = arith.constant 0 : i32
    %c0_i32_0 = arith.constant 0 : i32
    %c0_i32_1 = arith.constant 0 : i32
    return %arg1, %c0_i32, %c0_i32_0 : i32, i32, i32
  }
  func.func @transform_6(%arg0: i32, %arg1: i32) -> (i32, i32, i32) {
    %c0_i32 = arith.constant 0 : i32
    %c0_i32_0 = arith.constant 0 : i32
    %c0_i32_1 = arith.constant 0 : i32
    return %arg1, %c0_i32, %c0_i32_0 : i32, i32, i32
  }
  func.func @transform_7(%arg0: i32, %arg1: i32) -> (i32, i32, i32) {
    %c0_i32 = arith.constant 0 : i32
    %c0_i32_0 = arith.constant 0 : i32
    %c0_i32_1 = arith.constant 0 : i32
    return %arg1, %c0_i32, %c0_i32_0 : i32, i32, i32
  }
  func.func @transform_8(%arg0: i32, %arg1: i32) -> (i32, i32, i32) {
    %c0_i32 = arith.constant 0 : i32
    %c0_i32_0 = arith.constant 0 : i32
    %c0_i32_1 = arith.constant 0 : i32
    return %arg1, %c0_i32, %c0_i32_0 : i32, i32, i32
  }
  func.func @transform_9(%arg0: i32, %arg1: i32) -> (i32, i32, i32) {
    %c0_i32 = arith.constant 0 : i32
    %c0_i32_0 = arith.constant 0 : i32
    %c0_i32_1 = arith.constant 0 : i32
    return %arg1, %c0_i32, %c0_i32_0 : i32, i32, i32
  }
  func.func @transform_10(%arg0: i32, %arg1: i32) -> (i32, i32, i32) {
    %c0_i32 = arith.constant 0 : i32
    %c0_i32_0 = arith.constant 0 : i32
    %c0_i32_1 = arith.constant 0 : i32
    return %arg1, %c0_i32, %c0_i32_0 : i32, i32, i32
  }
  func.func @transform_11(%arg0: i32, %arg1: i32) -> (i32, i32, i32) {
    %c0_i32 = arith.constant 0 : i32
    %c0_i32_0 = arith.constant 0 : i32
    %c0_i32_1 = arith.constant 0 : i32
    return %arg1, %c0_i32, %c0_i32_0 : i32, i32, i32
  }
  func.func @transform_12(%arg0: i32, %arg1: i32) -> (i32, i32, i32) {
    %c0_i32 = arith.constant 0 : i32
    %c0_i32_0 = arith.constant 0 : i32
    %c0_i32_1 = arith.constant 0 : i32
    return %arg1, %c0_i32, %c0_i32_0 : i32, i32, i32
  }
  func.func @transform_13(%arg0: i32, %arg1: i32) -> (i32, i32, i32) {
    %c0_i32 = arith.constant 0 : i32
    %c0_i32_0 = arith.constant 0 : i32
    %c0_i32_1 = arith.constant 0 : i32
    return %arg1, %c0_i32, %c0_i32_0 : i32, i32, i32
  }
  func.func @transform_14(%arg0: i32, %arg1: i32) -> (i32, i32, i32) {
    %c0_i32 = arith.constant 0 : i32
    %c0_i32_0 = arith.constant 0 : i32
    %c0_i32_1 = arith.constant 0 : i32
    return %arg1, %c0_i32, %c0_i32_0 : i32, i32, i32
  }
  func.func @transform_15(%arg0: i32, %arg1: i32) -> (i32, i32, i32) {
    %c0_i32 = arith.constant 0 : i32
    %c0_i32_0 = arith.constant 0 : i32
    %c0_i32_1 = arith.constant 0 : i32
    return %arg0, %c0_i32, %c0_i32_0 : i32, i32, i32
  }
}

</mosaic_0001>

<llo_original>
// kernel: tpu_custom_call.1
$region0: #{tpu_custom_call.1}
  #allocation0 [shape = 'u32[]', space=smem, size = 0x4, offset = 0x4, fixed_abs, tag = 'smem constant byte address 0x4 - core index']
  #allocation1 [shape = 'u32[144,128]{1,0:T(1,128)}', space=vmem, size = 0x12000, scoped, tag = 'internal scratch']
  %s0 = inlined_call_operand.hbm [shape: f32[2,8,32], index: 0, kind: input, shape index: {}]
  %s1 = inlined_call_operand.hbm [shape: f32[8,8], index: 1, kind: input, shape index: {}]
  %s2 = inlined_call_operand.vmem [shape: f32[2,1,8], index: 2, kind: input, shape index: {}]
  %s3 = inlined_call_operand.vmem [shape: bf16[2,32,96], index: 3, kind: input, shape index: {}]
  %s4 = inlined_call_operand.vmem [shape: f32[2,1,96], index: 4, kind: input, shape index: {}]
  %s5 = inlined_call_operand.vmem [shape: bf16[2,32,32], index: 5, kind: input, shape index: {}]
  %s6 = inlined_call_operand.vmem [shape: f32[2,1,32], index: 6, kind: input, shape index: {}]
  %s7 = inlined_call_operand.vmem [shape: bf16[2,32,64], index: 7, kind: input, shape index: {}]
  %s8 = inlined_call_operand.vmem [shape: f32[2,1,64], index: 8, kind: input, shape index: {}]
  %s9 = inlined_call_operand.vmem [shape: bf16[2,64,32], index: 9, kind: input, shape index: {}]
  %s10 = inlined_call_operand.vmem [shape: f32[2,1,32], index: 10, kind: input, shape index: {}]
  %s11 = inlined_call_operand.vmem [shape: f32[2,1,32], index: 11, kind: input, shape index: {}]
  %s12 = inlined_call_operand.vmem [shape: f32[2,1,32], index: 12, kind: input, shape index: {}]
  %s13 = inlined_call_operand.vmem [shape: f32[2,1,32], index: 13, kind: input, shape index: {}]
  %s14 = inlined_call_operand.vmem [shape: f32[2,1,32], index: 14, kind: input, shape index: {}]
  %s15 = inlined_call_operand.hbm [shape: f32[2,8,32], index: 15, kind: output, shape index: {}]
  %s16 = sld [smem:[#allocation0]]
  $region105: #{tpu_custom_call.1} parent=0
    _
  %s18 = ssub.s32 1, %s16
  %s19 = scalar_select 0, %s18, %s16
  $region1: #{tpu_custom_call.1} parent=0
    #allocation2 [shape = 'u8[8192]{0}', space=vmem, size = 0x2000, scoped, tag = 'input window, operand 0']
    #allocation3 [shape = 's32[2]{0}', space=sflag, size = 0x8, scoped, tag = 'scoped memory for tpu_custom_call.1']
    #allocation4 [shape = 's32[2]{0}', space=sflag, size = 0x8, scoped, tag = 'scoped memory for tpu_custom_call.1']
    #allocation5 [shape = 'u8[4096]{0}', space=vmem, size = 0x1000, scoped, tag = 'input window, operand 1, single buffered']
    #allocation6 [shape = 's32[1]{0}', space=sflag, size = 0x4, scoped, tag = 'scoped memory for tpu_custom_call.1']
    #allocation7 [shape = 'u8[8192]{0}', space=vmem, size = 0x2000, scoped, tag = 'output window, operand 0']
    %20 = vsyncpa [#allocation3], 0
    %s21 = scalar_lea.sflag [#allocation3], 1
    %22 = vsyncpa %s21, 0
    %23 = vsyncpa [#allocation6], 0
    %24 = vsyncpa [#allocation4], 0
    %s25 = scalar_lea.sflag [#allocation4], 1
    %26 = vsyncpa %s25, 0
    loop: start=0, step=1, limit=6
    $region2: #{tpu_custom_call.1} parent=1 // loop_pre_header
      _
    $region3: #{tpu_custom_call.1} parent=1 // loop_header
      %s28 = sphi 0, %s32
      %p29 = scmp.ge.s32.totalorder %s28, 6
      %s35 = sphi 0, %s47
      %s36 = sphi 0, %s43
      %s37 = sphi 0, %s35
      %s38 = sphi 0, %s36
      %s39 = sphi 0, %s37
      %s40 = sphi 0, %s38
      %s50 = sphi 0, %s52
      %s53 = sphi 0, %s50
      %s54 = sphi 0, %s53
      %s70 = sphi 0, %s54
      %s74 = sphi 0, %s74
      %s76 = sphi 0, %s74
      %s77 = sphi 0, %s76
      %s91 = sphi 0, %s77
      %s97 = sphi 0, %s99
      %s100 = sphi 0, %s97
      %s101 = sphi 0, %s100
      %s117 = sphi 0, %s101
      %s123 = sphi 0, %s125
      %s126 = sphi 0, %s123
      %s127 = sphi 0, %s126
      %s143 = sphi 0, %s127
      %s149 = sphi 0, %s151
      %s152 = sphi 0, %s149
      %s153 = sphi 0, %s152
      %s169 = sphi 0, %s153
      %s175 = sphi 0, %s177
      %s178 = sphi 0, %s175
      %s179 = sphi 0, %s178
      %s195 = sphi 0, %s179
      %s201 = sphi 0, %s203
      %s204 = sphi 0, %s201
      %s205 = sphi 0, %s204
      %s221 = sphi 0, %s205
      %s227 = sphi 0, %s229
      %s230 = sphi 0, %s227
      %s231 = sphi 0, %s230
      %s247 = sphi 0, %s231
      %s253 = sphi 0, %s255
      %s256 = sphi 0, %s253
      %s257 = sphi 0, %s256
      %s273 = sphi 0, %s257
      %s279 = sphi 0, %s281
      %s282 = sphi 0, %s279
      %s283 = sphi 0, %s282
      %s299 = sphi 0, %s283
      %s305 = sphi 0, %s307
      %s308 = sphi 0, %s305
      %s309 = sphi 0, %s308
      %s325 = sphi 0, %s309
      %s331 = sphi 0, %s333
      %s334 = sphi 0, %s331
      %s335 = sphi 0, %s334
      %s351 = sphi 0, %s335
      %s357 = sphi 0, %s359
      %s360 = sphi 0, %s357
      %s361 = sphi 0, %s360
      %s377 = sphi 0, %s361
      %s383 = sphi 0, %s385
      %s386 = sphi 0, %s383
      %s387 = sphi 0, %s386
      %s403 = sphi 0, %s387
      %s409 = sphi 0, %s411
      %s412 = sphi 0, %s409
      %s413 = sphi 0, %s412
      %s429 = sphi 0, %s413
      %s435 = sphi 0, %s437
      %s438 = sphi 0, %s435
      %s439 = sphi 0, %s438
      %s455 = sphi 0, %s439
    $region4: #{tpu_custom_call.1} parent=1 // loop_header_branch
      %31 = sbr.rel (%p29) target = $region8
    $region5: #{tpu_custom_call.1} parent=1 // loop_body
      %s33 = ssub.s32 %s28, 1
      %s34 = ssub.s32 %s28, 2
      %s41 = sadd.s32 1, %s36
      %p42 = scmp.ge.s32.totalorder %s41, 2
      %s43 = scalar_select %p42, 0, %s41
      %s44 = sadd.s32 1, %s35
      %s45 = scalar_select %p42, %s44, %s35
      %p46 = scmp.ge.s32.totalorder %s45, 2
      %s47 = scalar_select %p46, 0, %s45
      %s48 = ssub.s32 %s35, %s47
      %p49 = scmp.eq.s32.totalorder %s48, 0
      %s51 = sadd.s32 %s50, 1
      %s52 = scalar_select %p49, %s50, %s51
      %p55 = pneg %p49
      %p56 = scmp.eq.s32.totalorder %s28, 3
      %p57 = por %p55, %p56
      %p58 = scmp.ne.s32.totalorder %s50, %s53
      %p59 = scmp.eq.s32.totalorder %s28, 0
      %p60 = por %p58, %p59
      %p61 = scmp.ne.s32.totalorder %s50, %s53
      %p62 = scmp.eq.s32.totalorder %s33, 3
      %p63 = por %p61, %p62
      %p64 = scmp.ne.s32.totalorder %s53, %s54
      %p65 = scmp.eq.s32.totalorder %s33, 0
      %p66 = por %p64, %p65
      %p67 = scmp.ne.s32.totalorder %s53, %s54
      %p68 = scmp.eq.s32.totalorder %s34, 3
      %p69 = por %p67, %p68
      %p71 = scmp.ne.s32.totalorder %s54, %s70
      %p72 = scmp.eq.s32.totalorder %s34, 0
      %p73 = por %p71, %p72
      %s75 = sadd.s32 %s74, 1
      %p78 = scmp.eq.s32.totalorder %s28, 3
      %p79 = scmp.ne.s32.totalorder %s74, %s76
      %p80 = scmp.eq.s32.totalorder %s28, 0
      %p81 = por %p79, %p80
      %p82 = scmp.ne.s32.totalorder %s74, %s76
      %p83 = scmp.eq.s32.totalorder %s33, 3
      %p84 = por %p82, %p83
      %p85 = scmp.ne.s32.totalorder %s76, %s77
      %p86 = scmp.eq.s32.totalorder %s33, 0
      %p87 = por %p85, %p86
      %p88 = scmp.ne.s32.totalorder %s76, %s77
      %p89 = scmp.eq.s32.totalorder %s34, 3
      %p90 = por %p88, %p89
      %p92 = scmp.ne.s32.totalorder %s77, %s91
      %p93 = scmp.eq.s32.totalorder %s34, 0
      %p94 = por %p92, %p93
      %s95 = ssub.s32 %s35, %s47
      %p96 = scmp.eq.s32.totalorder %s95, 0
      %s98 = sadd.s32 %s97, 1
      %s99 = scalar_select %p96, %s97, %s98
      %p102 = pneg %p96
      %p103 = scmp.eq.s32.totalorder %s28, 3
      %p104 = por %p102, %p103
      %p105 = scmp.ne.s32.totalorder %s97, %s100
      %p106 = scmp.eq.s32.totalorder %s28, 0
      %p107 = por %p105, %p106
      %p108 = scmp.ne.s32.totalorder %s97, %s100
      %p109 = scmp.eq.s32.totalorder %s33, 3
      %p110 = por %p108, %p109
      %p111 = scmp.ne.s32.totalorder %s100, %s101
      %p112 = scmp.eq.s32.totalorder %s33, 0
      %p113 = por %p111, %p112
      %p114 = scmp.ne.s32.totalorder %s100, %s101
      %p115 = scmp.eq.s32.totalorder %s34, 3
      %p116 = por %p114, %p115
      %p118 = scmp.ne.s32.totalorder %s101, %s117
      %p119 = scmp.eq.s32.totalorder %s34, 0
      %p120 = por %p118, %p119
      %s121 = ssub.s32 %s36, %s43
      %p122 = scmp.eq.s32.totalorder %s121, 0
      %s124 = sadd.s32 %s123, 1
      %s125 = scalar_select %p122, %s123, %s124
      %p128 = pneg %p122
      %p129 = scmp.eq.s32.totalorder %s28, 3
      %p130 = por %p128, %p129
      %p131 = scmp.ne.s32.totalorder %s123, %s126
      %p132 = scmp.eq.s32.totalorder %s28, 0
      %p133 = por %p131, %p132
      %p134 = scmp.ne.s32.totalorder %s123, %s126
      %p135 = scmp.eq.s32.totalorder %s33, 3
      %p136 = por %p134, %p135
      %p137 = scmp.ne.s32.totalorder %s126, %s127
      %p138 = scmp.eq.s32.totalorder %s33, 0
      %p139 = por %p137, %p138
      %p140 = scmp.ne.s32.totalorder %s126, %s127
      %p141 = scmp.eq.s32.totalorder %s34, 3
      %p142 = por %p140, %p141
      %p144 = scmp.ne.s32.totalorder %s127, %s143
      %p145 = scmp.eq.s32.totalorder %s34, 0
      %p146 = por %p144, %p145
      %s147 = ssub.s32 %s36, %s43
      %p148 = scmp.eq.s32.totalorder %s147, 0
      %s150 = sadd.s32 %s149, 1
      %s151 = scalar_select %p148, %s149, %s150
      %p154 = pneg %p148
      %p155 = scmp.eq.s32.totalorder %s28, 3
      %p156 = por %p154, %p155
      %p157 = scmp.ne.s32.totalorder %s149, %s152
      %p158 = scmp.eq.s32.totalorder %s28, 0
      %p159 = por %p157, %p158
      %p160 = scmp.ne.s32.totalorder %s149, %s152
      %p161 = scmp.eq.s32.totalorder %s33, 3
      %p162 = por %p160, %p161
      %p163 = scmp.ne.s32.totalorder %s152, %s153
      %p164 = scmp.eq.s32.totalorder %s33, 0
      %p165 = por %p163, %p164
      %p166 = scmp.ne.s32.totalorder %s152, %s153
      %p167 = scmp.eq.s32.totalorder %s34, 3
      %p168 = por %p166, %p167
      %p170 = scmp.ne.s32.totalorder %s153, %s169
      %p171 = scmp.eq.s32.totalorder %s34, 0
      %p172 = por %p170, %p171
      %s173 = ssub.s32 %s36, %s43
      %p174 = scmp.eq.s32.totalorder %s173, 0
      %s176 = sadd.s32 %s175, 1
      %s177 = scalar_select %p174, %s175, %s176
      %p180 = pneg %p174
      %p181 = scmp.eq.s32.totalorder %s28, 3
      %p182 = por %p180, %p181
      %p183 = scmp.ne.s32.totalorder %s175, %s178
      %p184 = scmp.eq.s32.totalorder %s28, 0
      %p185 = por %p183, %p184
      %p186 = scmp.ne.s32.totalorder %s175, %s178
      %p187 = scmp.eq.s32.totalorder %s33, 3
      %p188 = por %p186, %p187
      %p189 = scmp.ne.s32.totalorder %s178, %s179
      %p190 = scmp.eq.s32.totalorder %s33, 0
      %p191 = por %p189, %p190
      %p192 = scmp.ne.s32.totalorder %s178, %s179
      %p193 = scmp.eq.s32.totalorder %s34, 3
      %p194 = por %p192, %p193
      %p196 = scmp.ne.s32.totalorder %s179, %s195
      %p197 = scmp.eq.s32.totalorder %s34, 0
      %p198 = por %p196, %p197
      %s199 = ssub.s32 %s36, %s43
      %p200 = scmp.eq.s32.totalorder %s199, 0
      %s202 = sadd.s32 %s201, 1
      %s203 = scalar_select %p200, %s201, %s202
      %p206 = pneg %p200
      %p207 = scmp.eq.s32.totalorder %s28, 3
      %p208 = por %p206, %p207
      %p209 = scmp.ne.s32.totalorder %s201, %s204
      %p210 = scmp.eq.s32.totalorder %s28, 0
      %p211 = por %p209, %p210
      %p212 = scmp.ne.s32.totalorder %s201, %s204
      %p213 = scmp.eq.s32.totalorder %s33, 3
      %p214 = por %p212, %p213
      %p215 = scmp.ne.s32.totalorder %s204, %s205
      %p216 = scmp.eq.s32.totalorder %s33, 0
      %p217 = por %p215, %p216
      %p218 = scmp.ne.s32.totalorder %s204, %s205
      %p219 = scmp.eq.s32.totalorder %s34, 3
      %p220 = por %p218, %p219
      %p222 = scmp.ne.s32.totalorder %s205, %s221
      %p223 = scmp.eq.s32.totalorder %s34, 0
      %p224 = por %p222, %p223
      %s225 = ssub.s32 %s36, %s43
      %p226 = scmp.eq.s32.totalorder %s225, 0
      %s228 = sadd.s32 %s227, 1
      %s229 = scalar_select %p226, %s227, %s228
      %p232 = pneg %p226
      %p233 = scmp.eq.s32.totalorder %s28, 3
      %p234 = por %p232, %p233
      %p235 = scmp.ne.s32.totalorder %s227, %s230
      %p236 = scmp.eq.s32.totalorder %s28, 0
      %p237 = por %p235, %p236
      %p238 = scmp.ne.s32.totalorder %s227, %s230
      %p239 = scmp.eq.s32.totalorder %s33, 3
      %p240 = por %p238, %p239
      %p241 = scmp.ne.s32.totalorder %s230, %s231
      %p242 = scmp.eq.s32.totalorder %s33, 0
      %p243 = por %p241, %p242
      %p244 = scmp.ne.s32.totalorder %s230, %s231
      %p245 = scmp.eq.s32.totalorder %s34, 3
      %p246 = por %p244, %p245
      %p248 = scmp.ne.s32.totalorder %s231, %s247
      %p249 = scmp.eq.s32.totalorder %s34, 0
      %p250 = por %p248, %p249
      %s251 = ssub.s32 %s36, %s43
      %p252 = scmp.eq.s32.totalorder %s251, 0
      %s254 = sadd.s32 %s253, 1
      %s255 = scalar_select %p252, %s253, %s254
      %p258 = pneg %p252
      %p259 = scmp.eq.s32.totalorder %s28, 3
      %p260 = por %p258, %p259
      %p261 = scmp.ne.s32.totalorder %s253, %s256
      %p262 = scmp.eq.s32.totalorder %s28, 0
      %p263 = por %p261, %p262
      %p264 = scmp.ne.s32.totalorder %s253, %s256
      %p265 = scmp.eq.s32.totalorder %s33, 3
      %p266 = por %p264, %p265
      %p267 = scmp.ne.s32.totalorder %s256, %s257
      %p268 = scmp.eq.s32.totalorder %s33, 0
      %p269 = por %p267, %p268
      %p270 = scmp.ne.s32.totalorder %s256, %s257
      %p271 = scmp.eq.s32.totalorder %s34, 3
      %p272 = por %p270, %p271
      %p274 = scmp.ne.s32.totalorder %s257, %s273
      %p275 = scmp.eq.s32.totalorder %s34, 0
      %p276 = por %p274, %p275
      %s277 = ssub.s32 %s36, %s43
      %p278 = scmp.eq.s32.totalorder %s277, 0
      %s280 = sadd.s32 %s279, 1
      %s281 = scalar_select %p278, %s279, %s280
      %p284 = pneg %p278
      %p285 = scmp.eq.s32.totalorder %s28, 3
      %p286 = por %p284, %p285
      %p287 = scmp.ne.s32.totalorder %s279, %s282
      %p288 = scmp.eq.s32.totalorder %s28, 0
      %p289 = por %p287, %p288
      %p290 = scmp.ne.s32.totalorder %s279, %s282
      %p291 = scmp.eq.s32.totalorder %s33, 3
      %p292 = por %p290, %p291
      %p293 = scmp.ne.s32.totalorder %s282, %s283
      %p294 = scmp.eq.s32.totalorder %s33, 0
      %p295 = por %p293, %p294
      %p296 = scmp.ne.s32.totalorder %s282, %s283
      %p297 = scmp.eq.s32.totalorder %s34, 3
      %p298 = por %p296, %p297
      %p300 = scmp.ne.s32.totalorder %s283, %s299
      %p301 = scmp.eq.s32.totalorder %s34, 0
      %p302 = por %p300, %p301
      %s303 = ssub.s32 %s36, %s43
      %p304 = scmp.eq.s32.totalorder %s303, 0
      %s306 = sadd.s32 %s305, 1
      %s307 = scalar_select %p304, %s305, %s306
      %p310 = pneg %p304
      %p311 = scmp.eq.s32.totalorder %s28, 3
      %p312 = por %p310, %p311
      %p313 = scmp.ne.s32.totalorder %s305, %s308
      %p314 = scmp.eq.s32.totalorder %s28, 0
      %p315 = por %p313, %p314
      %p316 = scmp.ne.s32.totalorder %s305, %s308
      %p317 = scmp.eq.s32.totalorder %s33, 3
      %p318 = por %p316, %p317
      %p319 = scmp.ne.s32.totalorder %s308, %s309
      %p320 = scmp.eq.s32.totalorder %s33, 0
      %p321 = por %p319, %p320
      %p322 = scmp.ne.s32.totalorder %s308, %s309
      %p323 = scmp.eq.s32.totalorder %s34, 3
      %p324 = por %p322, %p323
      %p326 = scmp.ne.s32.totalorder %s309, %s325
      %p327 = scmp.eq.s32.totalorder %s34, 0
      %p328 = por %p326, %p327
      %s329 = ssub.s32 %s36, %s43
      %p330 = scmp.eq.s32.totalorder %s329, 0
      %s332 = sadd.s32 %s331, 1
      %s333 = scalar_select %p330, %s331, %s332
      %p336 = pneg %p330
      %p337 = scmp.eq.s32.totalorder %s28, 3
      %p338 = por %p336, %p337
      %p339 = scmp.ne.s32.totalorder %s331, %s334
      %p340 = scmp.eq.s32.totalorder %s28, 0
      %p341 = por %p339, %p340
      %p342 = scmp.ne.s32.totalorder %s331, %s334
      %p343 = scmp.eq.s32.totalorder %s33, 3
      %p344 = por %p342, %p343
      %p345 = scmp.ne.s32.totalorder %s334, %s335
      %p346 = scmp.eq.s32.totalorder %s33, 0
      %p347 = por %p345, %p346
      %p348 = scmp.ne.s32.totalorder %s334, %s335
      %p349 = scmp.eq.s32.totalorder %s34, 3
      %p350 = por %p348, %p349
      %p352 = scmp.ne.s32.totalorder %s335, %s351
      %p353 = scmp.eq.s32.totalorder %s34, 0
      %p354 = por %p352, %p353
      %s355 = ssub.s32 %s36, %s43
      %p356 = scmp.eq.s32.totalorder %s355, 0
      %s358 = sadd.s32 %s357, 1
      %s359 = scalar_select %p356, %s357, %s358
      %p362 = pneg %p356
      %p363 = scmp.eq.s32.totalorder %s28, 3
      %p364 = por %p362, %p363
      %p365 = scmp.ne.s32.totalorder %s357, %s360
      %p366 = scmp.eq.s32.totalorder %s28, 0
      %p367 = por %p365, %p366
      %p368 = scmp.ne.s32.totalorder %s357, %s360
      %p369 = scmp.eq.s32.totalorder %s33, 3
      %p370 = por %p368, %p369
      %p371 = scmp.ne.s32.totalorder %s360, %s361
      %p372 = scmp.eq.s32.totalorder %s33, 0
      %p373 = por %p371, %p372
      %p374 = scmp.ne.s32.totalorder %s360, %s361
      %p375 = scmp.eq.s32.totalorder %s34, 3
      %p376 = por %p374, %p375
      %p378 = scmp.ne.s32.totalorder %s361, %s377
      %p379 = scmp.eq.s32.totalorder %s34, 0
      %p380 = por %p378, %p379
      %s381 = ssub.s32 %s36, %s43
      %p382 = scmp.eq.s32.totalorder %s381, 0
      %s384 = sadd.s32 %s383, 1
      %s385 = scalar_select %p382, %s383, %s384
      %p388 = pneg %p382
      %p389 = scmp.eq.s32.totalorder %s28, 3
      %p390 = por %p388, %p389
      %p391 = scmp.ne.s32.totalorder %s383, %s386
      %p392 = scmp.eq.s32.totalorder %s28, 0
      %p393 = por %p391, %p392
      %p394 = scmp.ne.s32.totalorder %s383, %s386
      %p395 = scmp.eq.s32.totalorder %s33, 3
      %p396 = por %p394, %p395
      %p397 = scmp.ne.s32.totalorder %s386, %s387
      %p398 = scmp.eq.s32.totalorder %s33, 0
      %p399 = por %p397, %p398
      %p400 = scmp.ne.s32.totalorder %s386, %s387
      %p401 = scmp.eq.s32.totalorder %s34, 3
      %p402 = por %p400, %p401
      %p404 = scmp.ne.s32.totalorder %s387, %s403
      %p405 = scmp.eq.s32.totalorder %s34, 0
      %p406 = por %p404, %p405
      %s407 = ssub.s32 %s36, %s43
      %p408 = scmp.eq.s32.totalorder %s407, 0
      %s410 = sadd.s32 %s409, 1
      %s411 = scalar_select %p408, %s409, %s410
      %p414 = pneg %p408
      %p415 = scmp.eq.s32.totalorder %s28, 3
      %p416 = por %p414, %p415
      %p417 = scmp.ne.s32.totalorder %s409, %s412
      %p418 = scmp.eq.s32.totalorder %s28, 0
      %p419 = por %p417, %p418
      %p420 = scmp.ne.s32.totalorder %s409, %s412
      %p421 = scmp.eq.s32.totalorder %s33, 3
      %p422 = por %p420, %p421
      %p423 = scmp.ne.s32.totalorder %s412, %s413
      %p424 = scmp.eq.s32.totalorder %s33, 0
      %p425 = por %p423, %p424
      %p426 = scmp.ne.s32.totalorder %s412, %s413
      %p427 = scmp.eq.s32.totalorder %s34, 3
      %p428 = por %p426, %p427
      %p430 = scmp.ne.s32.totalorder %s413, %s429
      %p431 = scmp.eq.s32.totalorder %s34, 0
      %p432 = por %p430, %p431
      %s433 = ssub.s32 %s35, %s47
      %p434 = scmp.eq.s32.totalorder %s433, 0
      %s436 = sadd.s32 %s435, 1
      %s437 = scalar_select %p434, %s435, %s436
      %p440 = pneg %p434
      %p441 = scmp.eq.s32.totalorder %s28, 3
      %p442 = por %p440, %p441
      %p443 = scmp.ne.s32.totalorder %s435, %s438
      %p444 = scmp.eq.s32.totalorder %s28, 0
      %p445 = por %p443, %p444
      %p446 = scmp.ne.s32.totalorder %s435, %s438
      %p447 = scmp.eq.s32.totalorder %s33, 3
      %p448 = por %p446, %p447
      %p449 = scmp.ne.s32.totalorder %s438, %s439
      %p450 = scmp.eq.s32.totalorder %s33, 0
      %p451 = por %p449, %p450
      %p452 = scmp.ne.s32.totalorder %s438, %s439
      %p453 = scmp.eq.s32.totalorder %s34, 3
      %p454 = por %p452, %p453
      %p456 = scmp.ne.s32.totalorder %s439, %s455
      %p457 = scmp.eq.s32.totalorder %s34, 0
      %p458 = por %p456, %p457
      %p459 = scmp.le.s32.totalorder 1, %s28
      %p460 = scmp.lt.s32.totalorder %s28, 5
      %p461 = pnand %p459, %p460
      %p462 = pneg %p461
      // Predicated region
      $region9: #{tpu_custom_call.1} parent=5 // pred_check
        _
      $region10: #{tpu_custom_call.1} parent=5 // pred_check_branch
        %464 = sbr.rel (%p461) target = $region12
      $region11: #{tpu_custom_call.1} parent=5 // pred_region
        %s465 = ssub.s32 %s28, 1
        // Predicated region
        $region13: #{tpu_custom_call.1} parent=11 // pred_check
          %p466 = pneg %p87
        $region14: #{tpu_custom_call.1} parent=11 // pred_check_branch
          %468 = sbr.rel (%p466) target = $region16
        $region15: #{tpu_custom_call.1} parent=11 // pred_region
          %s470 = ssub.s32 128, 128
          %471 = vsyncadd [#allocation6], %s470
          %s473 = sshll.u32 [#allocation5], 4
          %s474 = int_to_ptr.vmem [resolvable:$true] %s473
          %476 = dma.hbm_to_vmem [thread:$0]  %s1, 128, %s474, [#allocation6]
        $region16: #{tpu_custom_call.1} parent=11 // pred_fallthru
          _
      $region12: #{tpu_custom_call.1} parent=5 // pred_fallthru
        _
      %p477 = scmp.lt.s32.totalorder %s28, 4
      // Predicated region
      $region17: #{tpu_custom_call.1} parent=5 // pred_check
        %p478 = pneg %p477
      $region18: #{tpu_custom_call.1} parent=5 // pred_check_branch
        %480 = sbr.rel (%p478) target = $region20
      $region19: #{tpu_custom_call.1} parent=5 // pred_region
        // Predicated region
        $region21: #{tpu_custom_call.1} parent=19 // pred_check
          %p481 = pneg %p60
        $region22: #{tpu_custom_call.1} parent=19 // pred_check_branch
          %483 = sbr.rel (%p481) target = $region24
        $region23: #{tpu_custom_call.1} parent=19 // pred_region
          %s484 = sand.u32 %s50, 1
          %s485 = scalar_lea.sflag [#allocation3], %s484
          %s486 = sand.u32 %s50, 1
          %s487 = smul.addr %s486, 8
          %s488 = scalar_lea.vmem [#allocation2], %s487
          %s490 = ssub.s32 128, 128
          %491 = vsyncadd %s485, %s490
          %s492 = smul.addr %s35, 128
          %s493 = scalar_lea.hbm %s0, %s492
          %s495 = sshll.u32 %s488, 4
          %s496 = int_to_ptr.vmem [resolvable:$true] %s495
          %498 = dma.hbm_to_vmem [thread:$0]  %s493, 128, %s496, %s485
        $region24: #{tpu_custom_call.1} parent=19 // pred_fallthru
          _
        // Predicated region
        $region25: #{tpu_custom_call.1} parent=19 // pred_check
          %p499 = pneg %p107
        $region26: #{tpu_custom_call.1} parent=19 // pred_check_branch
          %501 = sbr.rel (%p499) target = $region28
        $region27: #{tpu_custom_call.1} parent=19 // pred_region
          %p502 = scmp.lt.s32.totalorder %s35, 1
          %s503 = scalar_select %p502, %s35, 1
          %s504 = scalar_lea.vmem %s2, %s503
        $region28: #{tpu_custom_call.1} parent=19 // pred_fallthru
          _
        // Predicated region
        $region29: #{tpu_custom_call.1} parent=19 // pred_check
          %p505 = pneg %p133
        $region30: #{tpu_custom_call.1} parent=19 // pred_check_branch
          %507 = sbr.rel (%p505) target = $region32
        $region31: #{tpu_custom_call.1} parent=19 // pred_region
          %p508 = scmp.lt.s32.totalorder %s36, 1
          %s509 = scalar_select %p508, %s36, 1
          %s510 = smul.addr %s509, 4
          %s511 = smul.addr %s510, 4
          %s512 = scalar_lea.vmem %s3, %s511
        $region32: #{tpu_custom_call.1} parent=19 // pred_fallthru
          _
        // Predicated region
        $region33: #{tpu_custom_call.1} parent=19 // pred_check
          %p513 = pneg %p159
        $region34: #{tpu_custom_call.1} parent=19 // pred_check_branch
          %515 = sbr.rel (%p513) target = $region36
        $region35: #{tpu_custom_call.1} parent=19 // pred_region
          %p516 = scmp.lt.s32.totalorder %s36, 1
          %s517 = scalar_select %p516, %s36, 1
          %s518 = scalar_lea.vmem %s4, %s517
        $region36: #{tpu_custom_call.1} parent=19 // pred_fallthru
          _
        // Predicated region
        $region37: #{tpu_custom_call.1} parent=19 // pred_check
          %p519 = pneg %p185
        $region38: #{tpu_custom_call.1} parent=19 // pred_check_branch
          %521 = sbr.rel (%p519) target = $region40
        $region39: #{tpu_custom_call.1} parent=19 // pred_region
          %p522 = scmp.lt.s32.totalorder %s36, 1
          %s523 = scalar_select %p522, %s36, 1
          %s524 = smul.addr %s523, 4
          %s525 = smul.addr %s524, 4
          %s526 = scalar_lea.vmem %s5, %s525
        $region40: #{tpu_custom_call.1} parent=19 // pred_fallthru
          _
        // Predicated region
        $region41: #{tpu_custom_call.1} parent=19 // pred_check
          %p527 = pneg %p211
        $region42: #{tpu_custom_call.1} parent=19 // pred_check_branch
          %529 = sbr.rel (%p527) target = $region44
        $region43: #{tpu_custom_call.1} parent=19 // pred_region
          %p530 = scmp.lt.s32.totalorder %s36, 1
          %s531 = scalar_select %p530, %s36, 1
          %s532 = scalar_lea.vmem %s6, %s531
        $region44: #{tpu_custom_call.1} parent=19 // pred_fallthru
          _
        // Predicated region
        $region45: #{tpu_custom_call.1} parent=19 // pred_check
          %p533 = pneg %p237
        $region46: #{tpu_custom_call.1} parent=19 // pred_check_branch
          %535 = sbr.rel (%p533) target = $region48
        $region47: #{tpu_custom_call.1} parent=19 // pred_region
          %p536 = scmp.lt.s32.totalorder %s36, 1
          %s537 = scalar_select %p536, %s36, 1
          %s538 = smul.addr %s537, 4
          %s539 = smul.addr %s538, 4
          %s540 = scalar_lea.vmem %s7, %s539
        $region48: #{tpu_custom_call.1} parent=19 // pred_fallthru
          _
        // Predicated region
        $region49: #{tpu_custom_call.1} parent=19 // pred_check
          %p541 = pneg %p263
        $region50: #{tpu_custom_call.1} parent=19 // pred_check_branch
          %543 = sbr.rel (%p541) target = $region52
        $region51: #{tpu_custom_call.1} parent=19 // pred_region
          %p544 = scmp.lt.s32.totalorder %s36, 1
          %s545 = scalar_select %p544, %s36, 1
          %s546 = scalar_lea.vmem %s8, %s545
        $region52: #{tpu_custom_call.1} parent=19 // pred_fallthru
          _
        // Predicated region
        $region53: #{tpu_custom_call.1} parent=19 // pred_check
          %p547 = pneg %p289
        $region54: #{tpu_custom_call.1} parent=19 // pred_check_branch
          %549 = sbr.rel (%p547) target = $region56
        $region55: #{tpu_custom_call.1} parent=19 // pred_region
          %p550 = scmp.lt.s32.totalorder %s36, 1
          %s551 = scalar_select %p550, %s36, 1
          %s552 = smul.addr %s551, 8
          %s553 = smul.addr %s552, 4
          %s554 = scalar_lea.vmem %s9, %s553
        $region56: #{tpu_custom_call.1} parent=19 // pred_fallthru
          _
        // Predicated region
        $region57: #{tpu_custom_call.1} parent=19 // pred_check
          %p555 = pneg %p315
        $region58: #{tpu_custom_call.1} parent=19 // pred_check_branch
          %557 = sbr.rel (%p555) target = $region60
        $region59: #{tpu_custom_call.1} parent=19 // pred_region
          %p558 = scmp.lt.s32.totalorder %s36, 1
          %s559 = scalar_select %p558, %s36, 1
          %s560 = scalar_lea.vmem %s10, %s559
        $region60: #{tpu_custom_call.1} parent=19 // pred_fallthru
          _
        // Predicated region
        $region61: #{tpu_custom_call.1} parent=19 // pred_check
          %p561 = pneg %p341
        $region62: #{tpu_custom_call.1} parent=19 // pred_check_branch
          %563 = sbr.rel (%p561) target = $region64
        $region63: #{tpu_custom_call.1} parent=19 // pred_region
          %p564 = scmp.lt.s32.totalorder %s36, 1
          %s565 = scalar_select %p564, %s36, 1
          %s566 = scalar_lea.vmem %s11, %s565
        $region64: #{tpu_custom_call.1} parent=19 // pred_fallthru
          _
        // Predicated region
        $region65: #{tpu_custom_call.1} parent=19 // pred_check
          %p567 = pneg %p367
        $region66: #{tpu_custom_call.1} parent=19 // pred_check_branch
          %569 = sbr.rel (%p567) target = $region68
        $region67: #{tpu_custom_call.1} parent=19 // pred_region
          %p570 = scmp.lt.s32.totalorder %s36, 1
          %s571 = scalar_select %p570, %s36, 1
          %s572 = scalar_lea.vmem %s12, %s571
        $region68: #{tpu_custom_call.1} parent=19 // pred_fallthru
          _
        // Predicated region
        $region69: #{tpu_custom_call.1} parent=19 // pred_check
          %p573 = pneg %p393
        $region70: #{tpu_custom_call.1} parent=19 // pred_check_branch
          %575 = sbr.rel (%p573) target = $region72
        $region71: #{tpu_custom_call.1} parent=19 // pred_region
          %p576 = scmp.lt.s32.totalorder %s36, 1
          %s577 = scalar_select %p576, %s36, 1
          %s578 = scalar_lea.vmem %s13, %s577
        $region72: #{tpu_custom_call.1} parent=19 // pred_fallthru
          _
        // Predicated region
        $region73: #{tpu_custom_call.1} parent=19 // pred_check
          %p579 = pneg %p419
        $region74: #{tpu_custom_call.1} parent=19 // pred_check_branch
          %581 = sbr.rel (%p579) target = $region76
        $region75: #{tpu_custom_call.1} parent=19 // pred_region
          %p582 = scmp.lt.s32.totalorder %s36, 1
          %s583 = scalar_select %p582, %s36, 1
          %s584 = scalar_lea.vmem %s14, %s583
        $region76: #{tpu_custom_call.1} parent=19 // pred_fallthru
          _
      $region20: #{tpu_custom_call.1} parent=5 // pred_fallthru
        _
      %p585 = scmp.le.s32.totalorder 1, %s28
      %p586 = scmp.lt.s32.totalorder %s28, 5
      %p587 = pnand %p585, %p586
      %p588 = pneg %p587
      // Predicated region
      $region77: #{tpu_custom_call.1} parent=5 // pred_check
        _
      $region78: #{tpu_custom_call.1} parent=5 // pred_check_branch
        %590 = sbr.rel (%p587) target = $region80
      $region79: #{tpu_custom_call.1} parent=5 // pred_region
        %s591 = ssub.s32 %s28, 1
        %s592 = sand.u32 %s53, 1
        %s593 = scalar_lea.sflag [#allocation3], %s592
        %s594 = sand.u32 %s53, 1
        %s595 = smul.addr %s594, 8
        %s596 = scalar_lea.vmem [#allocation2], %s595
        // Predicated region
        $region81: #{tpu_custom_call.1} parent=79 // pred_check
          %p597 = pneg %p66
        $region82: #{tpu_custom_call.1} parent=79 // pred_check_branch
          %599 = sbr.rel (%p597) target = $region84
        $region83: #{tpu_custom_call.1} parent=79 // pred_region
          %600 = dma.done %s593, 128
        $region84: #{tpu_custom_call.1} parent=79 // pred_fallthru
          _
        // Predicated region
        $region85: #{tpu_custom_call.1} parent=79 // pred_check
          %p601 = pneg %p87
        $region86: #{tpu_custom_call.1} parent=79 // pred_check_branch
          %603 = sbr.rel (%p601) target = $region88
        $region87: #{tpu_custom_call.1} parent=79 // pred_region
          %604 = dma.done [#allocation6], 128
        $region88: #{tpu_custom_call.1} parent=79 // pred_fallthru
          _
        %s605 = sand.u32 %s53, 1
        %s606 = scalar_lea.sflag [#allocation3], %s605
        %s607 = sand.u32 %s53, 1
        %s608 = smul.addr %s607, 8
        %s609 = scalar_lea.vmem [#allocation2], %s608
        %p610 = pneg %p66
        %p611 = pneg %p63
        %p612 = pneg %p87
        %p613 = pneg %p84
        %p614 = scmp.lt.s32.totalorder %s37, 1
        %s615 = scalar_select %p614, %s37, 1
        %s616 = scalar_lea.vmem %s2, %s615
        %p617 = pneg %p113
        %p618 = pneg %p110
        %p619 = scmp.lt.s32.totalorder %s38, 1
        %s620 = scalar_select %p619, %s38, 1
        %s621 = smul.addr %s620, 4
        %s622 = smul.addr %s621, 4
        %s623 = scalar_lea.vmem %s3, %s622
        %p624 = pneg %p139
        %p625 = pneg %p136
        %p626 = scmp.lt.s32.totalorder %s38, 1
        %s627 = scalar_select %p626, %s38, 1
        %s628 = scalar_lea.vmem %s4, %s627
        %p629 = pneg %p165
        %p630 = pneg %p162
        %p631 = scmp.lt.s32.totalorder %s38, 1
        %s632 = scalar_select %p631, %s38, 1
        %s633 = smul.addr %s632, 4
        %s634 = smul.addr %s633, 4
        %s635 = scalar_lea.vmem %s5, %s634
        %p636 = pneg %p191
        %p637 = pneg %p188
        %p638 = scmp.lt.s32.totalorder %s38, 1
        %s639 = scalar_select %p638, %s38, 1
        %s640 = scalar_lea.vmem %s6, %s639
        %p641 = pneg %p217
        %p642 = pneg %p214
        %p643 = scmp.lt.s32.totalorder %s38, 1
        %s644 = scalar_select %p643, %s38, 1
        %s645 = smul.addr %s644, 4
        %s646 = smul.addr %s645, 4
        %s647 = scalar_lea.vmem %s7, %s646
        %p648 = pneg %p243
        %p649 = pneg %p240
        %p650 = scmp.lt.s32.totalorder %s38, 1
        %s651 = scalar_select %p650, %s38, 1
        %s652 = scalar_lea.vmem %s8, %s651
        %p653 = pneg %p269
        %p654 = pneg %p266
        %p655 = scmp.lt.s32.totalorder %s38, 1
        %s656 = scalar_select %p655, %s38, 1
        %s657 = smul.addr %s656, 8
        %s658 = smul.addr %s657, 4
        %s659 = scalar_lea.vmem %s9, %s658
        %p660 = pneg %p295
        %p661 = pneg %p292
        %p662 = scmp.lt.s32.totalorder %s38, 1
        %s663 = scalar_select %p662, %s38, 1
        %s664 = scalar_lea.vmem %s10, %s663
        %p665 = pneg %p321
        %p666 = pneg %p318
        %p667 = scmp.lt.s32.totalorder %s38, 1
        %s668 = scalar_select %p667, %s38, 1
        %s669 = scalar_lea.vmem %s11, %s668
        %p670 = pneg %p347
        %p671 = pneg %p344
        %p672 = scmp.lt.s32.totalorder %s38, 1
        %s673 = scalar_select %p672, %s38, 1
        %s674 = scalar_lea.vmem %s12, %s673
        %p675 = pneg %p373
        %p676 = pneg %p370
        %p677 = scmp.lt.s32.totalorder %s38, 1
        %s678 = scalar_select %p677, %s38, 1
        %s679 = scalar_lea.vmem %s13, %s678
        %p680 = pneg %p399
        %p681 = pneg %p396
        %p682 = scmp.lt.s32.totalorder %s38, 1
        %s683 = scalar_select %p682, %s38, 1
        %s684 = scalar_lea.vmem %s14, %s683
        %p685 = pneg %p425
        %p686 = pneg %p422
        %p687 = pneg %p451
        %p688 = pneg %p448
        %s689 = sand.u32 %s438, 1
        %s690 = scalar_lea.sflag [#allocation4], %s689
        %s691 = sand.u32 %s438, 1
        %s692 = smul.addr %s691, 8
        %s693 = scalar_lea.vmem [#allocation7], %s692
        %p694 = scmp.lt.s32.totalorder %s37, 1
        %s695 = scalar_select %p694, %s37, 1
        %s696 = scalar_lea.vmem %s2, %s695
        %p697 = scmp.lt.s32.totalorder %s38, 1
        %s698 = scalar_select %p697, %s38, 1
        %s699 = smul.addr %s698, 4
        %s700 = smul.addr %s699, 4
        %s701 = scalar_lea.vmem %s3, %s700
        %p702 = scmp.lt.s32.totalorder %s38, 1
        %s703 = scalar_select %p702, %s38, 1
        %s704 = scalar_lea.vmem %s4, %s703
        %p705 = scmp.lt.s32.totalorder %s38, 1
        %s706 = scalar_select %p705, %s38, 1
        %s707 = smul.addr %s706, 4
        %s708 = smul.addr %s707, 4
        %s709 = scalar_lea.vmem %s5, %s708
        %p710 = scmp.lt.s32.totalorder %s38, 1
        %s711 = scalar_select %p710, %s38, 1
        %s712 = scalar_lea.vmem %s6, %s711
        %p713 = scmp.lt.s32.totalorder %s38, 1
        %s714 = scalar_select %p713, %s38, 1
        %s715 = smul.addr %s714, 4
        %s716 = smul.addr %s715, 4
        %s717 = scalar_lea.vmem %s7, %s716
        %p718 = scmp.lt.s32.totalorder %s38, 1
        %s719 = scalar_select %p718, %s38, 1
        %s720 = scalar_lea.vmem %s8, %s719
        %p721 = scmp.lt.s32.totalorder %s38, 1
        %s722 = scalar_select %p721, %s38, 1
        %s723 = smul.addr %s722, 8
        %s724 = smul.addr %s723, 4
        %s725 = scalar_lea.vmem %s9, %s724
        %p726 = scmp.lt.s32.totalorder %s38, 1
        %s727 = scalar_select %p726, %s38, 1
        %s728 = scalar_lea.vmem %s10, %s727
        %p729 = scmp.lt.s32.totalorder %s38, 1
        %s730 = scalar_select %p729, %s38, 1
        %s731 = scalar_lea.vmem %s11, %s730
        %p732 = scmp.lt.s32.totalorder %s38, 1
        %s733 = scalar_select %p732, %s38, 1
        %s734 = scalar_lea.vmem %s12, %s733
        %p735 = scmp.lt.s32.totalorder %s38, 1
        %s736 = scalar_select %p735, %s38, 1
        %s737 = scalar_lea.vmem %s13, %s736
        %p738 = scmp.lt.s32.totalorder %s38, 1
        %s739 = scalar_select %p738, %s38, 1
        %s740 = scalar_lea.vmem %s14, %s739
        %p742 = scmp.eq.s32.totalorder %s38, 0
        // Predicated region
        $region89: #{tpu_custom_call.1} parent=79 // pred_check
          %p743 = pneg %p742
        $region90: #{tpu_custom_call.1} parent=79 // pred_check_branch
          %745 = sbr.rel (%p743) target = $region92
        $region91: #{tpu_custom_call.1} parent=79 // pred_region
          %v746 = vld [vmem:[%s596] sm:$0xff]
          %vm747 = vcmask 261120
          %748 = vst.msk [vmem:[%s693] sm:$0xff] %vm747, %v746
        $region92: #{tpu_custom_call.1} parent=79 // pred_fallthru
          _
        %v749 = vld [vmem:[%s693] sm:$0xff]
        %v750 = vld [vmem:[#allocation5] sm:$0xff]
        %v751 = vld [vmem:[%s696] sm:$0x1]
        %v753 = vlaneseq
        %v754 = vshrl.u32 %v753, 7
        %v755 = vsub.s32 0, %v754
        %v756 = vrot.slane %v751, %v755
        %v758 = vadd.f32 %v750, %v756
        %v759 = vpack.c.bf16 %v749, %v749
        %v760 = vld [vmem:[%s701] sm:$0xf]
        %v761 = vld [vmem:[%s701 + $0x4] sm:$0xf]
        %v762 = vld [vmem:[%s701 + $0x8] sm:$0xf]
        %v763 = vld [vmem:[%s701 + $0xc] sm:$0xf]
        %v764 = vld [vmem:[%s704] sm:$0x1]
        %v766 = vlaneseq
        %v767 = vshrl.u32 %v766, 7
        %v768 = vsub.s32 0, %v767
        %v769 = vrot.slane %v764, %v768
        %v775 = vunpack.c.l.b16 %v760
        %v776 = vunpack.c.l.b16 %v761
        %v777 = vunpack.c.l.b16 %v762
        %v778 = vunpack.c.l.b16 %v763
        %v779 = vpack.c.b16 %v776, %v775
        %v780 = vpack.c.b16 %v778, %v777
        %vm783 = vcmask 261120
        %v785 = vsel %vm783, %v759, 0
        %787 = vmatprep.subr.bf16.mxu0 0
        %788 = vmatpush1.bf16.msra.mxu0 0
        %789 = vmatprep.subr.bf16.mxu0 0
        %790 = vmatpush1.bf16.msra.mxu0 0
        %791 = vmatprep.subr.bf16.mxu0 0
        %792 = vmatpush1.bf16.msra.mxu0 0
        %793 = vmatprep.subr.bf16.mxu0 0
        %794 = vmatpush1.bf16.msra.mxu0 0
        %795 = vmatprep.subr.bf16.mxu0 0
        %796 = vmatpush1.bf16.msra.mxu0 0
        %797 = vmatprep.subr.bf16.mxu0 0
        %798 = vmatpush1.bf16.msra.mxu0 0
        %799 = vmatprep.subr.bf16.mxu0 0
        %800 = vmatpush1.bf16.msra.mxu0 %v780
        %801 = vmatprep.subr.bf16.mxu0 0
        %802 = vmatpush1.bf16.msra.mxu0 %v779
        %803 = vmatprep.subr.bf16.mxu0 0
        %804 = vmatpush2.bf16.msra.mxu0 0
        %805 = vmatprep.subr.bf16.mxu0 0
        %806 = vmatpush2.bf16.msra.mxu0 0
        %807 = vmatprep.subr.bf16.mxu0 0
        %808 = vmatpush2.bf16.msra.mxu0 0
        %809 = vmatprep.subr.bf16.mxu0 0
        %810 = vmatpush2.bf16.msra.mxu0 0
        %811 = vmatprep.subr.bf16.mxu0 0
        %812 = vmatpush2.bf16.msra.mxu0 0
        %813 = vmatprep.subr.bf16.mxu0 0
        %814 = vmatpush2.bf16.msra.mxu0 0
        %815 = vmatprep.subr.bf16.mxu0 0
        %816 = vmatpush2.bf16.msra.mxu0 0
        %817 = vmatprep.subr.bf16.mxu0 0
        %818 = vmatpush2.bf16.msra.mxu0 0
        %819 = vmatprep.mubr.bf16.mxu0 0
        %820 = vmatmul.mubr.bf16.gmra.mxu0 %v785
        %v821 = vpop.f32.mrf.mxu0
        %v822 = vadd.f32 %v769, %v821
        %v823 = vpop.f32.mrf.mxu0
        %v824 = vpop.f32.mrf.mxu0
        %v825 = vpop.f32.mrf.mxu0
        %826 = vdwg.mxu0
        %828 = vrot.lane.b32.xlu0 %v822, 120
        %v829 = vpop.permute.xlu0 %828
        %831 = vrot.lane.b32.xlu0 %v822, 112
        %v832 = vpop.permute.xlu0 %831
        %834 = vrot.lane.b32.xlu0 %v822, 104
        %v835 = vpop.permute.xlu0 %834
        %v837 = vcombine.low %v822, %v832
        %v838 = vcombine.high %v822, %v832
        %v840 = vunpack.c.l.s4 1983009808
        %v841 = vunpack.c.0.s8 %v840
        %v842 = vlaneseq
        %v843 = vshrl.u32 %v842, 7
        %v844 = vsub.s32 %v841, %v843
        %v845 = vrot.slane %v837, %v844
        %v847 = vunpack.c.l.s4 1983009808
        %v848 = vunpack.c.0.s8 %v847
        %v849 = vlaneseq
        %v850 = vshrl.u32 %v849, 7
        %v851 = vsub.s32 %v848, %v850
        %v852 = vrot.slane %v838, %v851
        %v853 = vcombine.low %v829, %v835
        %v854 = vcombine.high %v829, %v835
        %v856 = vunpack.c.l.s4 1983009808
        %v857 = vunpack.c.0.s8 %v856
        %v858 = vlaneseq
        %v859 = vshrl.u32 %v858, 7
        %v860 = vsub.s32 %v857, %v859
        %v861 = vrot.slane %v853, %v860
        %v863 = vunpack.c.l.s4 1983009808
        %v864 = vunpack.c.0.s8 %v863
        %v865 = vlaneseq
        %v866 = vshrl.u32 %v865, 7
        %v867 = vsub.s32 %v864, %v866
        %v868 = vrot.slane %v854, %v867
        %v869 = vcombine.low %v845, %v861
        %v870 = vcombine.high %v845, %v861
        %v872 = vunpack.c.l.s4 1934713408
        %v873 = vunpack.c.0.s8 %v872
        %v874 = vlaneseq
        %v875 = vshrl.u32 %v874, 7
        %v876 = vsub.s32 %v873, %v875
        %v877 = vrot.slane %v869, %v876
        %v879 = vunpack.c.l.s4 1934713408
        %v880 = vunpack.c.0.s8 %v879
        %v881 = vlaneseq
        %v882 = vshrl.u32 %v881, 7
        %v883 = vsub.s32 %v880, %v882
        %v884 = vrot.slane %v870, %v883
        %v885 = vcombine.low %v852, %v868
        %v886 = vcombine.high %v852, %v868
        %v888 = vunpack.c.l.s4 1934713408
        %v889 = vunpack.c.0.s8 %v888
        %v890 = vlaneseq
        %v891 = vshrl.u32 %v890, 7
        %v892 = vsub.s32 %v889, %v891
        %v893 = vrot.slane %v885, %v892
        %v895 = vunpack.c.l.s4 1934713408
        %v896 = vunpack.c.0.s8 %v895
        %v897 = vlaneseq
        %v898 = vshrl.u32 %v897, 7
        %v899 = vsub.s32 %v896, %v898
        %v900 = vrot.slane %v886, %v899
        %v901 = vcombine.high %v877, 0.0
        %v902 = vcombine.high %v884, 0.0
        %v903 = vcombine.high %v893, 0.0
        %v904 = vcombine.high %v900, 0.0
        %v905 = vcombine.low %v877, %v884
        %v907 = vunpack.c.l.s4 1983009808
        %v908 = vunpack.c.0.s8 %v907
        %v909 = vlaneseq
        %v910 = vshrl.u32 %v909, 7
        %v911 = vsub.s32 %v908, %v910
        %v912 = vrot.slane %v905, %v911
        %v913 = vcombine.low %v901, %v902
        %v915 = vunpack.c.l.s4 1983009808
        %v916 = vunpack.c.0.s8 %v915
        %v917 = vlaneseq
        %v918 = vshrl.u32 %v917, 7
        %v919 = vsub.s32 %v916, %v918
        %v920 = vrot.slane %v913, %v919
        %v921 = vcombine.low %v893, %v900
        %v923 = vunpack.c.l.s4 1983009808
        %v924 = vunpack.c.0.s8 %v923
        %v925 = vlaneseq
        %v926 = vshrl.u32 %v925, 7
        %v927 = vsub.s32 %v924, %v926
        %v928 = vrot.slane %v921, %v927
        %v929 = vcombine.low %v903, %v904
        %v931 = vunpack.c.l.s4 1983009808
        %v932 = vunpack.c.0.s8 %v931
        %v933 = vlaneseq
        %v934 = vshrl.u32 %v933, 7
        %v935 = vsub.s32 %v932, %v934
        %v936 = vrot.slane %v929, %v935
        %v937 = vcombine.low %v912, %v920
        %v938 = vcombine.high %v912, %v920
        %v940 = vunpack.c.l.s4 1934713408
        %v941 = vunpack.c.0.s8 %v940
        %v942 = vlaneseq
        %v943 = vshrl.u32 %v942, 7
        %v944 = vsub.s32 %v941, %v943
        %v945 = vrot.slane %v937, %v944
        %v947 = vunpack.c.l.s4 1934713408
        %v948 = vunpack.c.0.s8 %v947
        %v949 = vlaneseq
        %v950 = vshrl.u32 %v949, 7
        %v951 = vsub.s32 %v948, %v950
        %v952 = vrot.slane %v938, %v951
        %v953 = vcombine.low %v928, %v936
        %v954 = vcombine.high %v928, %v936
        %v956 = vunpack.c.l.s4 1934713408
        %v957 = vunpack.c.0.s8 %v956
        %v958 = vlaneseq
        %v959 = vshrl.u32 %v958, 7
        %v960 = vsub.s32 %v957, %v959
        %v961 = vrot.slane %v953, %v960
        %v963 = vunpack.c.l.s4 1934713408
        %v964 = vunpack.c.0.s8 %v963
        %v965 = vlaneseq
        %v966 = vshrl.u32 %v965, 7
        %v967 = vsub.s32 %v964, %v966
        %v968 = vrot.slane %v954, %v967
        %v969 = vcombine.low %v945, %v961
        %v970 = vcombine.high %v945, %v961
        %v971 = vcombine.low %v952, %v968
        %v972 = vcombine.high %v952, %v968
        %v973 = vmul.f32 %v969, 0.35355338
        %v974 = vmul.f32 %v970, 0.35355338
        %v975 = vmul.f32 %v971, 0.35355338
        %v976 = vmul.f32 %v972, 0.35355338
        %977 = vrot.lane.b32.xlu0 %v822, 96
        %v978 = vpop.permute.xlu0 %977
        %979 = vrot.lane.b32.xlu0 %v829, 96
        %v980 = vpop.permute.xlu0 %979
        %981 = vrot.lane.b32.xlu0 %v832, 96
        %v982 = vpop.permute.xlu0 %981
        %983 = vrot.lane.b32.xlu0 %v835, 96
        %v984 = vpop.permute.xlu0 %983
        %v989 = vcombine.low %v978, %v982
        %v990 = vcombine.high %v978, %v982
        %v992 = vunpack.c.l.s4 1983009808
        %v993 = vunpack.c.0.s8 %v992
        %v994 = vlaneseq
        %v995 = vshrl.u32 %v994, 7
        %v996 = vsub.s32 %v993, %v995
        %v997 = vrot.slane %v989, %v996
        %v999 = vunpack.c.l.s4 1983009808
        %v1000 = vunpack.c.0.s8 %v999
        %v1001 = vlaneseq
        %v1002 = vshrl.u32 %v1001, 7
        %v1003 = vsub.s32 %v1000, %v1002
        %v1004 = vrot.slane %v990, %v1003
        %v1005 = vcombine.low %v980, %v984
        %v1006 = vcombine.high %v980, %v984
        %v1008 = vunpack.c.l.s4 1983009808
        %v1009 = vunpack.c.0.s8 %v1008
        %v1010 = vlaneseq
        %v1011 = vshrl.u32 %v1010, 7
        %v1012 = vsub.s32 %v1009, %v1011
        %v1013 = vrot.slane %v1005, %v1012
        %v1015 = vunpack.c.l.s4 1983009808
        %v1016 = vunpack.c.0.s8 %v1015
        %v1017 = vlaneseq
        %v1018 = vshrl.u32 %v1017, 7
        %v1019 = vsub.s32 %v1016, %v1018
        %v1020 = vrot.slane %v1006, %v1019
        %v1021 = vcombine.low %v997, %v1013
        %v1022 = vcombine.high %v997, %v1013
        %v1024 = vunpack.c.l.s4 1934713408
        %v1025 = vunpack.c.0.s8 %v1024
        %v1026 = vlaneseq
        %v1027 = vshrl.u32 %v1026, 7
        %v1028 = vsub.s32 %v1025, %v1027
        %v1029 = vrot.slane %v1021, %v1028
        %v1031 = vunpack.c.l.s4 1934713408
        %v1032 = vunpack.c.0.s8 %v1031
        %v1033 = vlaneseq
        %v1034 = vshrl.u32 %v1033, 7
        %v1035 = vsub.s32 %v1032, %v1034
        %v1036 = vrot.slane %v1022, %v1035
        %v1037 = vcombine.low %v1004, %v1020
        %v1038 = vcombine.high %v1004, %v1020
        %v1040 = vunpack.c.l.s4 1934713408
        %v1041 = vunpack.c.0.s8 %v1040
        %v1042 = vlaneseq
        %v1043 = vshrl.u32 %v1042, 7
        %v1044 = vsub.s32 %v1041, %v1043
        %v1045 = vrot.slane %v1037, %v1044
        %v1047 = vunpack.c.l.s4 1934713408
        %v1048 = vunpack.c.0.s8 %v1047
        %v1049 = vlaneseq
        %v1050 = vshrl.u32 %v1049, 7
        %v1051 = vsub.s32 %v1048, %v1050
        %v1052 = vrot.slane %v1038, %v1051
        %v1053 = vcombine.high %v1029, 0.0
        %v1054 = vcombine.high %v1036, 0.0
        %v1055 = vcombine.high %v1045, 0.0
        %v1056 = vcombine.high %v1052, 0.0
        %v1057 = vcombine.low %v1029, %v1036
        %v1059 = vunpack.c.l.s4 1983009808
        %v1060 = vunpack.c.0.s8 %v1059
        %v1061 = vlaneseq
        %v1062 = vshrl.u32 %v1061, 7
        %v1063 = vsub.s32 %v1060, %v1062
        %v1064 = vrot.slane %v1057, %v1063
        %v1065 = vcombine.low %v1053, %v1054
        %v1067 = vunpack.c.l.s4 1983009808
        %v1068 = vunpack.c.0.s8 %v1067
        %v1069 = vlaneseq
        %v1070 = vshrl.u32 %v1069, 7
        %v1071 = vsub.s32 %v1068, %v1070
        %v1072 = vrot.slane %v1065, %v1071
        %v1073 = vcombine.low %v1045, %v1052
        %v1075 = vunpack.c.l.s4 1983009808
        %v1076 = vunpack.c.0.s8 %v1075
        %v1077 = vlaneseq
        %v1078 = vshrl.u32 %v1077, 7
        %v1079 = vsub.s32 %v1076, %v1078
        %v1080 = vrot.slane %v1073, %v1079
        %v1081 = vcombine.low %v1055, %v1056
        %v1083 = vunpack.c.l.s4 1983009808
        %v1084 = vunpack.c.0.s8 %v1083
        %v1085 = vlaneseq
        %v1086 = vshrl.u32 %v1085, 7
        %v1087 = vsub.s32 %v1084, %v1086
        %v1088 = vrot.slane %v1081, %v1087
        %v1089 = vcombine.low %v1064, %v1072
        %v1090 = vcombine.high %v1064, %v1072
        %v1092 = vunpack.c.l.s4 1934713408
        %v1093 = vunpack.c.0.s8 %v1092
        %v1094 = vlaneseq
        %v1095 = vshrl.u32 %v1094, 7
        %v1096 = vsub.s32 %v1093, %v1095
        %v1097 = vrot.slane %v1089, %v1096
        %v1099 = vunpack.c.l.s4 1934713408
        %v1100 = vunpack.c.0.s8 %v1099
        %v1101 = vlaneseq
        %v1102 = vshrl.u32 %v1101, 7
        %v1103 = vsub.s32 %v1100, %v1102
        %v1104 = vrot.slane %v1090, %v1103
        %v1105 = vcombine.low %v1080, %v1088
        %v1106 = vcombine.high %v1080, %v1088
        %v1108 = vunpack.c.l.s4 1934713408
        %v1109 = vunpack.c.0.s8 %v1108
        %v1110 = vlaneseq
        %v1111 = vshrl.u32 %v1110, 7
        %v1112 = vsub.s32 %v1109, %v1111
        %v1113 = vrot.slane %v1105, %v1112
        %v1115 = vunpack.c.l.s4 1934713408
        %v1116 = vunpack.c.0.s8 %v1115
        %v1117 = vlaneseq
        %v1118 = vshrl.u32 %v1117, 7
        %v1119 = vsub.s32 %v1116, %v1118
        %v1120 = vrot.slane %v1106, %v1119
        %v1121 = vcombine.low %v1097, %v1113
        %v1122 = vcombine.high %v1097, %v1113
        %v1123 = vcombine.low %v1104, %v1120
        %v1124 = vcombine.high %v1104, %v1120
        %1125 = vrot.lane.b32.xlu0 %v822, 64
        %v1126 = vpop.permute.xlu0 %1125
        %1127 = vrot.lane.b32.xlu0 %v829, 64
        %v1128 = vpop.permute.xlu0 %1127
        %1129 = vrot.lane.b32.xlu0 %v832, 64
        %v1130 = vpop.permute.xlu0 %1129
        %1131 = vrot.lane.b32.xlu0 %v835, 64
        %v1132 = vpop.permute.xlu0 %1131
        %v1137 = vcombine.low %v1126, %v1130
        %v1138 = vcombine.high %v1126, %v1130
        %v1140 = vunpack.c.l.s4 1983009808
        %v1141 = vunpack.c.0.s8 %v1140
        %v1142 = vlaneseq
        %v1143 = vshrl.u32 %v1142, 7
        %v1144 = vsub.s32 %v1141, %v1143
        %v1145 = vrot.slane %v1137, %v1144
        %v1147 = vunpack.c.l.s4 1983009808
        %v1148 = vunpack.c.0.s8 %v1147
        %v1149 = vlaneseq
        %v1150 = vshrl.u32 %v1149, 7
        %v1151 = vsub.s32 %v1148, %v1150
        %v1152 = vrot.slane %v1138, %v1151
        %v1153 = vcombine.low %v1128, %v1132
        %v1154 = vcombine.high %v1128, %v1132
        %v1156 = vunpack.c.l.s4 1983009808
        %v1157 = vunpack.c.0.s8 %v1156
        %v1158 = vlaneseq
        %v1159 = vshrl.u32 %v1158, 7
        %v1160 = vsub.s32 %v1157, %v1159
        %v1161 = vrot.slane %v1153, %v1160
        %v1163 = vunpack.c.l.s4 1983009808
        %v1164 = vunpack.c.0.s8 %v1163
        %v1165 = vlaneseq
        %v1166 = vshrl.u32 %v1165, 7
        %v1167 = vsub.s32 %v1164, %v1166
        %v1168 = vrot.slane %v1154, %v1167
        %v1169 = vcombine.low %v1145, %v1161
        %v1170 = vcombine.high %v1145, %v1161
        %v1172 = vunpack.c.l.s4 1934713408
        %v1173 = vunpack.c.0.s8 %v1172
        %v1174 = vlaneseq
        %v1175 = vshrl.u32 %v1174, 7
        %v1176 = vsub.s32 %v1173, %v1175
        %v1177 = vrot.slane %v1169, %v1176
        %v1179 = vunpack.c.l.s4 1934713408
        %v1180 = vunpack.c.0.s8 %v1179
        %v1181 = vlaneseq
        %v1182 = vshrl.u32 %v1181, 7
        %v1183 = vsub.s32 %v1180, %v1182
        %v1184 = vrot.slane %v1170, %v1183
        %v1185 = vcombine.low %v1152, %v1168
        %v1186 = vcombine.high %v1152, %v1168
        %v1188 = vunpack.c.l.s4 1934713408
        %v1189 = vunpack.c.0.s8 %v1188
        %v1190 = vlaneseq
        %v1191 = vshrl.u32 %v1190, 7
        %v1192 = vsub.s32 %v1189, %v1191
        %v1193 = vrot.slane %v1185, %v1192
        %v1195 = vunpack.c.l.s4 1934713408
        %v1196 = vunpack.c.0.s8 %v1195
        %v1197 = vlaneseq
        %v1198 = vshrl.u32 %v1197, 7
        %v1199 = vsub.s32 %v1196, %v1198
        %v1200 = vrot.slane %v1186, %v1199
        %v1201 = vcombine.high %v1177, 0.0
        %v1202 = vcombine.high %v1184, 0.0
        %v1203 = vcombine.high %v1193, 0.0
        %v1204 = vcombine.high %v1200, 0.0
        %v1205 = vcombine.low %v1177, %v1184
        %v1207 = vunpack.c.l.s4 1983009808
        %v1208 = vunpack.c.0.s8 %v1207
        %v1209 = vlaneseq
        %v1210 = vshrl.u32 %v1209, 7
        %v1211 = vsub.s32 %v1208, %v1210
        %v1212 = vrot.slane %v1205, %v1211
        %v1213 = vcombine.low %v1201, %v1202
        %v1215 = vunpack.c.l.s4 1983009808
        %v1216 = vunpack.c.0.s8 %v1215
        %v1217 = vlaneseq
        %v1218 = vshrl.u32 %v1217, 7
        %v1219 = vsub.s32 %v1216, %v1218
        %v1220 = vrot.slane %v1213, %v1219
        %v1221 = vcombine.low %v1193, %v1200
        %v1223 = vunpack.c.l.s4 1983009808
        %v1224 = vunpack.c.0.s8 %v1223
        %v1225 = vlaneseq
        %v1226 = vshrl.u32 %v1225, 7
        %v1227 = vsub.s32 %v1224, %v1226
        %v1228 = vrot.slane %v1221, %v1227
        %v1229 = vcombine.low %v1203, %v1204
        %v1231 = vunpack.c.l.s4 1983009808
        %v1232 = vunpack.c.0.s8 %v1231
        %v1233 = vlaneseq
        %v1234 = vshrl.u32 %v1233, 7
        %v1235 = vsub.s32 %v1232, %v1234
        %v1236 = vrot.slane %v1229, %v1235
        %v1237 = vcombine.low %v1212, %v1220
        %v1238 = vcombine.high %v1212, %v1220
        %v1240 = vunpack.c.l.s4 1934713408
        %v1241 = vunpack.c.0.s8 %v1240
        %v1242 = vlaneseq
        %v1243 = vshrl.u32 %v1242, 7
        %v1244 = vsub.s32 %v1241, %v1243
        %v1245 = vrot.slane %v1237, %v1244
        %v1247 = vunpack.c.l.s4 1934713408
        %v1248 = vunpack.c.0.s8 %v1247
        %v1249 = vlaneseq
        %v1250 = vshrl.u32 %v1249, 7
        %v1251 = vsub.s32 %v1248, %v1250
        %v1252 = vrot.slane %v1238, %v1251
        %v1253 = vcombine.low %v1228, %v1236
        %v1254 = vcombine.high %v1228, %v1236
        %v1256 = vunpack.c.l.s4 1934713408
        %v1257 = vunpack.c.0.s8 %v1256
        %v1258 = vlaneseq
        %v1259 = vshrl.u32 %v1258, 7
        %v1260 = vsub.s32 %v1257, %v1259
        %v1261 = vrot.slane %v1253, %v1260
        %v1263 = vunpack.c.l.s4 1934713408
        %v1264 = vunpack.c.0.s8 %v1263
        %v1265 = vlaneseq
        %v1266 = vshrl.u32 %v1265, 7
        %v1267 = vsub.s32 %v1264, %v1266
        %v1268 = vrot.slane %v1254, %v1267
        %v1269 = vcombine.low %v1245, %v1261
        %v1270 = vcombine.high %v1245, %v1261
        %v1271 = vcombine.low %v1252, %v1268
        %v1272 = vcombine.high %v1252, %v1268
        %v1273 = vpack.c.bf16 %v973, %v973
        %v1274 = vpack.c.bf16 %v974, %v974
        %v1275 = vpack.c.bf16 %v975, %v975
        %v1276 = vpack.c.bf16 %v976, %v976
        %v1277 = vpack.c.bf16 %v1121, %v1121
        %v1278 = vpack.c.bf16 %v1122, %v1122
        %v1279 = vpack.c.bf16 %v1123, %v1123
        %v1280 = vpack.c.bf16 %v1124, %v1124
        %vm1281 = vcmask 64512
        %v1283 = vsel %vm1281, %v1273, 0
        %v1286 = vsel %vm1281, %v1277, 0
        %1288 = vmatprep.subr.bf16.mxu0 0
        %1289 = vmatpush1.bf16.xpose.msra.mxu0 0
        %1290 = vmatprep.subr.bf16.mxu0 0
        %1291 = vmatpush1.bf16.xpose.msra.mxu0 0
        %1292 = vmatprep.subr.bf16.mxu0 0
        %1293 = vmatpush1.bf16.xpose.msra.mxu0 0
        %1294 = vmatprep.subr.bf16.mxu0 0
        %1295 = vmatpush1.bf16.xpose.msra.mxu0 0
        %1296 = vmatprep.subr.bf16.mxu0 0
        %1297 = vmatpush1.bf16.xpose.msra.mxu0 0
        %1298 = vmatprep.subr.bf16.mxu0 0
        %1299 = vmatpush1.bf16.xpose.msra.mxu0 0
        %1300 = vmatprep.subr.bf16.mxu0 0
        %1301 = vmatpush1.bf16.xpose.msra.mxu0 0
        %1302 = vmatprep.subr.bf16.mxu0 0
        %1303 = vmatpush1.bf16.xpose.msra.mxu0 %v1286
        %1304 = vmatprep.subr.bf16.mxu0 0
        %1305 = vmatpush2.bf16.xpose.msra.mxu0 0
        %1306 = vmatprep.subr.bf16.mxu0 0
        %1307 = vmatpush2.bf16.xpose.msra.mxu0 0
        %1308 = vmatprep.subr.bf16.mxu0 0
        %1309 = vmatpush2.bf16.xpose.msra.mxu0 0
        %1310 = vmatprep.subr.bf16.mxu0 0
        %1311 = vmatpush2.bf16.xpose.msra.mxu0 0
        %1312 = vmatprep.subr.bf16.mxu0 0
        %1313 = vmatpush2.bf16.xpose.msra.mxu0 0
        %1314 = vmatprep.subr.bf16.mxu0 0
        %1315 = vmatpush2.bf16.xpose.msra.mxu0 0
        %1316 = vmatprep.subr.bf16.mxu0 0
        %1317 = vmatpush2.bf16.xpose.msra.mxu0 0
        %1318 = vmatprep.subr.bf16.mxu0 0
        %1319 = vmatpush2.bf16.xpose.msra.mxu0 0
        %1320 = vmatprep.mubr.bf16.mxu0 0
        %1321 = vmatmul.mubr.bf16.gmra.mxu0 %v1283
        %v1322 = vpop.f32.mrf.mxu0
        %v1323 = vadd.f32 %v758, %v1322
        %v1324 = vpop.f32.mrf.mxu0
        %v1325 = vpop.f32.mrf.mxu0
        %v1326 = vpop.f32.mrf.mxu0
        %1327 = vdwg.mxu0
        %v1329 = vsel %vm1281, %v1274, 0
        %v1332 = vsel %vm1281, %v1278, 0
        %1334 = vmatprep.subr.bf16.mxu0 0
        %1335 = vmatpush1.bf16.xpose.msra.mxu0 0
        %1336 = vmatprep.subr.bf16.mxu0 0
        %1337 = vmatpush1.bf16.xpose.msra.mxu0 0
        %1338 = vmatprep.subr.bf16.mxu0 0
        %1339 = vmatpush1.bf16.xpose.msra.mxu0 0
        %1340 = vmatprep.subr.bf16.mxu0 0
        %1341 = vmatpush1.bf16.xpose.msra.mxu0 0
        %1342 = vmatprep.subr.bf16.mxu0 0
        %1343 = vmatpush1.bf16.xpose.msra.mxu0 0
        %1344 = vmatprep.subr.bf16.mxu0 0
        %1345 = vmatpush1.bf16.xpose.msra.mxu0 0
        %1346 = vmatprep.subr.bf16.mxu0 0
        %1347 = vmatpush1.bf16.xpose.msra.mxu0 0
        %1348 = vmatprep.subr.bf16.mxu0 0
        %1349 = vmatpush1.bf16.xpose.msra.mxu0 %v1332
        %1350 = vmatprep.subr.bf16.mxu0 0
        %1351 = vmatpush2.bf16.xpose.msra.mxu0 0
        %1352 = vmatprep.subr.bf16.mxu0 0
        %1353 = vmatpush2.bf16.xpose.msra.mxu0 0
        %1354 = vmatprep.subr.bf16.mxu0 0
        %1355 = vmatpush2.bf16.xpose.msra.mxu0 0
        %1356 = vmatprep.subr.bf16.mxu0 0
        %1357 = vmatpush2.bf16.xpose.msra.mxu0 0
        %1358 = vmatprep.subr.bf16.mxu0 0
        %1359 = vmatpush2.bf16.xpose.msra.mxu0 0
        %1360 = vmatprep.subr.bf16.mxu0 0
        %1361 = vmatpush2.bf16.xpose.msra.mxu0 0
        %1362 = vmatprep.subr.bf16.mxu0 0
        %1363 = vmatpush2.bf16.xpose.msra.mxu0 0
        %1364 = vmatprep.subr.bf16.mxu0 0
        %1365 = vmatpush2.bf16.xpose.msra.mxu0 0
        %1366 = vmatprep.mubr.bf16.mxu0 0
        %1367 = vmatmul.mubr.bf16.gmra.mxu0 %v1329
        %v1368 = vpop.f32.mrf.mxu0
        %v1369 = vadd.f32 %v758, %v1368
        %v1370 = vpop.f32.mrf.mxu0
        %v1371 = vpop.f32.mrf.mxu0
        %v1372 = vpop.f32.mrf.mxu0
        %1373 = vdwg.mxu0
        %v1375 = vsel %vm1281, %v1275, 0
        %v1378 = vsel %vm1281, %v1279, 0
        %1380 = vmatprep.subr.bf16.mxu0 0
        %1381 = vmatpush1.bf16.xpose.msra.mxu0 0
        %1382 = vmatprep.subr.bf16.mxu0 0
        %1383 = vmatpush1.bf16.xpose.msra.mxu0 0
        %1384 = vmatprep.subr.bf16.mxu0 0
        %1385 = vmatpush1.bf16.xpose.msra.mxu0 0
        %1386 = vmatprep.subr.bf16.mxu0 0
        %1387 = vmatpush1.bf16.xpose.msra.mxu0 0
        %1388 = vmatprep.subr.bf16.mxu0 0
        %1389 = vmatpush1.bf16.xpose.msra.mxu0 0
        %1390 = vmatprep.subr.bf16.mxu0 0
        %1391 = vmatpush1.bf16.xpose.msra.mxu0 0
        %1392 = vmatprep.subr.bf16.mxu0 0
        %1393 = vmatpush1.bf16.xpose.msra.mxu0 0
        %1394 = vmatprep.subr.bf16.mxu0 0
        %1395 = vmatpush1.bf16.xpose.msra.mxu0 %v1378
        %1396 = vmatprep.subr.bf16.mxu0 0
        %1397 = vmatpush2.bf16.xpose.msra.mxu0 0
        %1398 = vmatprep.subr.bf16.mxu0 0
        %1399 = vmatpush2.bf16.xpose.msra.mxu0 0
        %1400 = vmatprep.subr.bf16.mxu0 0
        %1401 = vmatpush2.bf16.xpose.msra.mxu0 0
        %1402 = vmatprep.subr.bf16.mxu0 0
        %1403 = vmatpush2.bf16.xpose.msra.mxu0 0
        %1404 = vmatprep.subr.bf16.mxu0 0
        %1405 = vmatpush2.bf16.xpose.msra.mxu0 0
        %1406 = vmatprep.subr.bf16.mxu0 0
        %1407 = vmatpush2.bf16.xpose.msra.mxu0 0
        %1408 = vmatprep.subr.bf16.mxu0 0
        %1409 = vmatpush2.bf16.xpose.msra.mxu0 0
        %1410 = vmatprep.subr.bf16.mxu0 0
        %1411 = vmatpush2.bf16.xpose.msra.mxu0 0
        %1412 = vmatprep.mubr.bf16.mxu0 0
        %1413 = vmatmul.mubr.bf16.gmra.mxu0 %v1375
        %v1414 = vpop.f32.mrf.mxu0
        %v1415 = vadd.f32 %v758, %v1414
        %v1416 = vpop.f32.mrf.mxu0
        %v1417 = vpop.f32.mrf.mxu0
        %v1418 = vpop.f32.mrf.mxu0
        %1419 = vdwg.mxu0
        %v1421 = vsel %vm1281, %v1276, 0
        %v1424 = vsel %vm1281, %v1280, 0
        %1426 = vmatprep.subr.bf16.mxu0 0
        %1427 = vmatpush1.bf16.xpose.msra.mxu0 0
        %1428 = vmatprep.subr.bf16.mxu0 0
        %1429 = vmatpush1.bf16.xpose.msra.mxu0 0
        %1430 = vmatprep.subr.bf16.mxu0 0
        %1431 = vmatpush1.bf16.xpose.msra.mxu0 0
        %1432 = vmatprep.subr.bf16.mxu0 0
        %1433 = vmatpush1.bf16.xpose.msra.mxu0 0
        %1434 = vmatprep.subr.bf16.mxu0 0
        %1435 = vmatpush1.bf16.xpose.msra.mxu0 0
        %1436 = vmatprep.subr.bf16.mxu0 0
        %1437 = vmatpush1.bf16.xpose.msra.mxu0 0
        %1438 = vmatprep.subr.bf16.mxu0 0
        %1439 = vmatpush1.bf16.xpose.msra.mxu0 0
        %1440 = vmatprep.subr.bf16.mxu0 0
        %1441 = vmatpush1.bf16.xpose.msra.mxu0 %v1424
        %1442 = vmatprep.subr.bf16.mxu0 0
        %1443 = vmatpush2.bf16.xpose.msra.mxu0 0
        %1444 = vmatprep.subr.bf16.mxu0 0
        %1445 = vmatpush2.bf16.xpose.msra.mxu0 0
        %1446 = vmatprep.subr.bf16.mxu0 0
        %1447 = vmatpush2.bf16.xpose.msra.mxu0 0
        %1448 = vmatprep.subr.bf16.mxu0 0
        %1449 = vmatpush2.bf16.xpose.msra.mxu0 0
        %1450 = vmatprep.subr.bf16.mxu0 0
        %1451 = vmatpush2.bf16.xpose.msra.mxu0 0
        %1452 = vmatprep.subr.bf16.mxu0 0
        %1453 = vmatpush2.bf16.xpose.msra.mxu0 0
        %1454 = vmatprep.subr.bf16.mxu0 0
        %1455 = vmatpush2.bf16.xpose.msra.mxu0 0
        %1456 = vmatprep.subr.bf16.mxu0 0
        %1457 = vmatpush2.bf16.xpose.msra.mxu0 0
        %1458 = vmatprep.mubr.bf16.mxu0 0
        %1459 = vmatmul.mubr.bf16.gmra.mxu0 %v1421
        %v1460 = vpop.f32.mrf.mxu0
        %v1461 = vadd.f32 %v758, %v1460
        %v1462 = vpop.f32.mrf.mxu0
        %v1463 = vpop.f32.mrf.mxu0
        %v1464 = vpop.f32.mrf.mxu0
        %1465 = vdwg.mxu0
        %v1466 = vsel %vm1281, %v1323, -inf
        %1467 = vmax.xlane.f32.xlu0 %v1466
        %v1468 = vpop.xlane.xlu0 %1467
        %v1469 = vsel %vm1281, %v1369, -inf
        %1470 = vmax.xlane.f32.xlu0 %v1469
        %v1471 = vpop.xlane.xlu0 %1470
        %v1472 = vsel %vm1281, %v1415, -inf
        %1473 = vmax.xlane.f32.xlu0 %v1472
        %v1474 = vpop.xlane.xlu0 %1473
        %v1475 = vsel %vm1281, %v1461, -inf
        %1476 = vmax.xlane.f32.xlu0 %v1475
        %v1477 = vpop.xlane.xlu0 %1476
        %v1478 = vsub.f32 %v1323, %v1468
        %v1479 = vsub.f32 %v1369, %v1471
        %v1480 = vsub.f32 %v1415, %v1474
        %v1481 = vsub.f32 %v1461, %v1477
        %v1482 = vmul.f32 %v1478, 1.442695
        %v1483 = vpow.pop %v1482
        %v1484 = vmul.f32 %v1479, 1.442695
        %v1485 = vpow.pop %v1484
        %v1486 = vmul.f32 %v1480, 1.442695
        %v1487 = vpow.pop %v1486
        %v1488 = vmul.f32 %v1481, 1.442695
        %v1489 = vpow.pop %v1488
        %v1490 = vsel %vm1281, %v1483, 0.0
        %1491 = vadd.xlane.f32.xlu0 %v1490
        %v1492 = vpop.xlane.xlu0 %1491
        %v1493 = vsel %vm1281, %v1485, 0.0
        %1494 = vadd.xlane.f32.xlu0 %v1493
        %v1495 = vpop.xlane.xlu0 %1494
        %v1496 = vsel %vm1281, %v1487, 0.0
        %1497 = vadd.xlane.f32.xlu0 %v1496
        %v1498 = vpop.xlane.xlu0 %1497
        %v1499 = vsel %vm1281, %v1489, 0.0
        %1500 = vadd.xlane.f32.xlu0 %v1499
        %v1501 = vpop.xlane.xlu0 %1500
        %v1502 = vrcp.pop %v1492
        %v1503 = vrcp.pop %v1495
        %v1504 = vrcp.pop %v1498
        %v1505 = vrcp.pop %v1501
        %v1506 = vmul.f32 %v1483, %v1502
        %v1507 = vmul.f32 %v1485, %v1503
        %v1508 = vmul.f32 %v1487, %v1504
        %v1509 = vmul.f32 %v1489, %v1505
        %v1510 = vpack.c.bf16 %v1506, %v1506
        %v1511 = vpack.c.bf16 %v1507, %v1507
        %v1512 = vpack.c.bf16 %v1508, %v1508
        %v1513 = vpack.c.bf16 %v1509, %v1509
        %v1514 = vpack.c.bf16 %v1269, %v1269
        %v1515 = vpack.c.bf16 %v1270, %v1270
        %v1516 = vpack.c.bf16 %v1271, %v1271
        %v1517 = vpack.c.bf16 %v1272, %v1272
        %v1519 = vsel %vm1281, %v1510, 0
        %vm1521 = vcmask 1043456
        %v1523 = vsel %vm1521, %v1514, 0
        %1525 = vmatprep.subr.bf16.mxu0 0
        %1526 = vmatpush1.bf16.msra.mxu0 0
        %1527 = vmatprep.subr.bf16.mxu0 0
        %1528 = vmatpush1.bf16.msra.mxu0 0
        %1529 = vmatprep.subr.bf16.mxu0 0
        %1530 = vmatpush1.bf16.msra.mxu0 0
        %1531 = vmatprep.subr.bf16.mxu0 0
        %1532 = vmatpush1.bf16.msra.mxu0 0
        %1533 = vmatprep.subr.bf16.mxu0 0
        %1534 = vmatpush1.bf16.msra.mxu0 0
        %1535 = vmatprep.subr.bf16.mxu0 0
        %1536 = vmatpush1.bf16.msra.mxu0 0
        %1537 = vmatprep.subr.bf16.mxu0 0
        %1538 = vmatpush1.bf16.msra.mxu0 0
        %1539 = vmatprep.subr.bf16.mxu0 0
        %1540 = vmatpush1.bf16.msra.mxu0 %v1523
        %1541 = vmatprep.subr.bf16.mxu0 0
        %1542 = vmatpush2.bf16.msra.mxu0 0
        %1543 = vmatprep.subr.bf16.mxu0 0
        %1544 = vmatpush2.bf16.msra.mxu0 0
        %1545 = vmatprep.subr.bf16.mxu0 0
        %1546 = vmatpush2.bf16.msra.mxu0 0
        %1547 = vmatprep.subr.bf16.mxu0 0
        %1548 = vmatpush2.bf16.msra.mxu0 0
        %1549 = vmatprep.subr.bf16.mxu0 0
        %1550 = vmatpush2.bf16.msra.mxu0 0
        %1551 = vmatprep.subr.bf16.mxu0 0
        %1552 = vmatpush2.bf16.msra.mxu0 0
        %1553 = vmatprep.subr.bf16.mxu0 0
        %1554 = vmatpush2.bf16.msra.mxu0 0
        %1555 = vmatprep.subr.bf16.mxu0 0
        %1556 = vmatpush2.bf16.msra.mxu0 0
        %1557 = vmatprep.mubr.bf16.mxu0 0
        %1558 = vmatmul.mubr.bf16.gmra.mxu0 %v1519
        %v1559 = vpop.f32.mrf.mxu0
        %v1560 = vadd.f32 0.0, %v1559
        %v1561 = vpop.f32.mrf.mxu0
        %v1562 = vpop.f32.mrf.mxu0
        %v1563 = vpop.f32.mrf.mxu0
        %1564 = vdwg.mxu0
        %v1566 = vsel %vm1281, %v1511, 0
        %v1569 = vsel %vm1521, %v1515, 0
        %1571 = vmatprep.subr.bf16.mxu0 0
        %1572 = vmatpush1.bf16.msra.mxu0 0
        %1573 = vmatprep.subr.bf16.mxu0 0
        %1574 = vmatpush1.bf16.msra.mxu0 0
        %1575 = vmatprep.subr.bf16.mxu0 0
        %1576 = vmatpush1.bf16.msra.mxu0 0
        %1577 = vmatprep.subr.bf16.mxu0 0
        %1578 = vmatpush1.bf16.msra.mxu0 0
        %1579 = vmatprep.subr.bf16.mxu0 0
        %1580 = vmatpush1.bf16.msra.mxu0 0
        %1581 = vmatprep.subr.bf16.mxu0 0
        %1582 = vmatpush1.bf16.msra.mxu0 0
        %1583 = vmatprep.subr.bf16.mxu0 0
        %1584 = vmatpush1.bf16.msra.mxu0 0
        %1585 = vmatprep.subr.bf16.mxu0 0
        %1586 = vmatpush1.bf16.msra.mxu0 %v1569
        %1587 = vmatprep.subr.bf16.mxu0 0
        %1588 = vmatpush2.bf16.msra.mxu0 0
        %1589 = vmatprep.subr.bf16.mxu0 0
        %1590 = vmatpush2.bf16.msra.mxu0 0
        %1591 = vmatprep.subr.bf16.mxu0 0
        %1592 = vmatpush2.bf16.msra.mxu0 0
        %1593 = vmatprep.subr.bf16.mxu0 0
        %1594 = vmatpush2.bf16.msra.mxu0 0
        %1595 = vmatprep.subr.bf16.mxu0 0
        %1596 = vmatpush2.bf16.msra.mxu0 0
        %1597 = vmatprep.subr.bf16.mxu0 0
        %1598 = vmatpush2.bf16.msra.mxu0 0
        %1599 = vmatprep.subr.bf16.mxu0 0
        %1600 = vmatpush2.bf16.msra.mxu0 0
        %1601 = vmatprep.subr.bf16.mxu0 0
        %1602 = vmatpush2.bf16.msra.mxu0 0
        %1603 = vmatprep.mubr.bf16.mxu0 0
        %1604 = vmatmul.mubr.bf16.gmra.mxu0 %v1566
        %v1605 = vpop.f32.mrf.mxu0
        %v1606 = vadd.f32 0.0, %v1605
        %v1607 = vpop.f32.mrf.mxu0
        %v1608 = vpop.f32.mrf.mxu0
        %v1609 = vpop.f32.mrf.mxu0
        %1610 = vdwg.mxu0
        %v1612 = vsel %vm1281, %v1512, 0
        %v1615 = vsel %vm1521, %v1516, 0
        %1617 = vmatprep.subr.bf16.mxu0 0
        %1618 = vmatpush1.bf16.msra.mxu0 0
        %1619 = vmatprep.subr.bf16.mxu0 0
        %1620 = vmatpush1.bf16.msra.mxu0 0
        %1621 = vmatprep.subr.bf16.mxu0 0
        %1622 = vmatpush1.bf16.msra.mxu0 0
        %1623 = vmatprep.subr.bf16.mxu0 0
        %1624 = vmatpush1.bf16.msra.mxu0 0
        %1625 = vmatprep.subr.bf16.mxu0 0
        %1626 = vmatpush1.bf16.msra.mxu0 0
        %1627 = vmatprep.subr.bf16.mxu0 0
        %1628 = vmatpush1.bf16.msra.mxu0 0
        %1629 = vmatprep.subr.bf16.mxu0 0
        %1630 = vmatpush1.bf16.msra.mxu0 0
        %1631 = vmatprep.subr.bf16.mxu0 0
        %1632 = vmatpush1.bf16.msra.mxu0 %v1615
        %1633 = vmatprep.subr.bf16.mxu0 0
        %1634 = vmatpush2.bf16.msra.mxu0 0
        %1635 = vmatprep.subr.bf16.mxu0 0
        %1636 = vmatpush2.bf16.msra.mxu0 0
        %1637 = vmatprep.subr.bf16.mxu0 0
        %1638 = vmatpush2.bf16.msra.mxu0 0
        %1639 = vmatprep.subr.bf16.mxu0 0
        %1640 = vmatpush2.bf16.msra.mxu0 0
        %1641 = vmatprep.subr.bf16.mxu0 0
        %1642 = vmatpush2.bf16.msra.mxu0 0
        %1643 = vmatprep.subr.bf16.mxu0 0
        %1644 = vmatpush2.bf16.msra.mxu0 0
        %1645 = vmatprep.subr.bf16.mxu0 0
        %1646 = vmatpush2.bf16.msra.mxu0 0
        %1647 = vmatprep.subr.bf16.mxu0 0
        %1648 = vmatpush2.bf16.msra.mxu0 0
        %1649 = vmatprep.mubr.bf16.mxu0 0
        %1650 = vmatmul.mubr.bf16.gmra.mxu0 %v1612
        %v1651 = vpop.f32.mrf.mxu0
        %v1652 = vadd.f32 0.0, %v1651
        %v1653 = vpop.f32.mrf.mxu0
        %v1654 = vpop.f32.mrf.mxu0
        %v1655 = vpop.f32.mrf.mxu0
        %1656 = vdwg.mxu0
        %v1658 = vsel %vm1281, %v1513, 0
        %v1661 = vsel %vm1521, %v1517, 0
        %1663 = vmatprep.subr.bf16.mxu0 0
        %1664 = vmatpush1.bf16.msra.mxu0 0
        %1665 = vmatprep.subr.bf16.mxu0 0
        %1666 = vmatpush1.bf16.msra.mxu0 0
        %1667 = vmatprep.subr.bf16.mxu0 0
        %1668 = vmatpush1.bf16.msra.mxu0 0
        %1669 = vmatprep.subr.bf16.mxu0 0
        %1670 = vmatpush1.bf16.msra.mxu0 0
        %1671 = vmatprep.subr.bf16.mxu0 0
        %1672 = vmatpush1.bf16.msra.mxu0 0
        %1673 = vmatprep.subr.bf16.mxu0 0
        %1674 = vmatpush1.bf16.msra.mxu0 0
        %1675 = vmatprep.subr.bf16.mxu0 0
        %1676 = vmatpush1.bf16.msra.mxu0 0
        %1677 = vmatprep.subr.bf16.mxu0 0
        %1678 = vmatpush1.bf16.msra.mxu0 %v1661
        %1679 = vmatprep.subr.bf16.mxu0 0
        %1680 = vmatpush2.bf16.msra.mxu0 0
        %1681 = vmatprep.subr.bf16.mxu0 0
        %1682 = vmatpush2.bf16.msra.mxu0 0
        %1683 = vmatprep.subr.bf16.mxu0 0
        %1684 = vmatpush2.bf16.msra.mxu0 0
        %1685 = vmatprep.subr.bf16.mxu0 0
        %1686 = vmatpush2.bf16.msra.mxu0 0
        %1687 = vmatprep.subr.bf16.mxu0 0
        %1688 = vmatpush2.bf16.msra.mxu0 0
        %1689 = vmatprep.subr.bf16.mxu0 0
        %1690 = vmatpush2.bf16.msra.mxu0 0
        %1691 = vmatprep.subr.bf16.mxu0 0
        %1692 = vmatpush2.bf16.msra.mxu0 0
        %1693 = vmatprep.subr.bf16.mxu0 0
        %1694 = vmatpush2.bf16.msra.mxu0 0
        %1695 = vmatprep.mubr.bf16.mxu0 0
        %1696 = vmatmul.mubr.bf16.gmra.mxu0 %v1658
        %v1697 = vpop.f32.mrf.mxu0
        %v1698 = vadd.f32 0.0, %v1697
        %v1699 = vpop.f32.mrf.mxu0
        %v1700 = vpop.f32.mrf.mxu0
        %v1701 = vpop.f32.mrf.mxu0
        %1702 = vdwg.mxu0
        %v1703 = vcombine.low %v1560, %v1652
        %v1704 = vcombine.high %v1560, %v1652
        %v1706 = vunpack.c.l.s4 1983009808
        %v1707 = vunpack.c.0.s8 %v1706
        %v1708 = vlaneseq
        %v1709 = vshrl.u32 %v1708, 7
        %v1710 = vsub.s32 %v1707, %v1709
        %v1711 = vrot.slane %v1703, %v1710
        %v1713 = vunpack.c.l.s4 1983009808
        %v1714 = vunpack.c.0.s8 %v1713
        %v1715 = vlaneseq
        %v1716 = vshrl.u32 %v1715, 7
        %v1717 = vsub.s32 %v1714, %v1716
        %v1718 = vrot.slane %v1704, %v1717
        %v1719 = vcombine.low %v1606, %v1698
        %v1720 = vcombine.high %v1606, %v1698
        %v1722 = vunpack.c.l.s4 1983009808
        %v1723 = vunpack.c.0.s8 %v1722
        %v1724 = vlaneseq
        %v1725 = vshrl.u32 %v1724, 7
        %v1726 = vsub.s32 %v1723, %v1725
        %v1727 = vrot.slane %v1719, %v1726
        %v1729 = vunpack.c.l.s4 1983009808
        %v1730 = vunpack.c.0.s8 %v1729
        %v1731 = vlaneseq
        %v1732 = vshrl.u32 %v1731, 7
        %v1733 = vsub.s32 %v1730, %v1732
        %v1734 = vrot.slane %v1720, %v1733
        %v1735 = vcombine.low %v1711, %v1727
        %v1736 = vcombine.high %v1711, %v1727
        %v1738 = vunpack.c.l.s4 1934713408
        %v1739 = vunpack.c.0.s8 %v1738
        %v1740 = vlaneseq
        %v1741 = vshrl.u32 %v1740, 7
        %v1742 = vsub.s32 %v1739, %v1741
        %v1743 = vrot.slane %v1735, %v1742
        %v1745 = vunpack.c.l.s4 1934713408
        %v1746 = vunpack.c.0.s8 %v1745
        %v1747 = vlaneseq
        %v1748 = vshrl.u32 %v1747, 7
        %v1749 = vsub.s32 %v1746, %v1748
        %v1750 = vrot.slane %v1736, %v1749
        %v1751 = vcombine.low %v1718, %v1734
        %v1752 = vcombine.high %v1718, %v1734
        %v1754 = vunpack.c.l.s4 1934713408
        %v1755 = vunpack.c.0.s8 %v1754
        %v1756 = vlaneseq
        %v1757 = vshrl.u32 %v1756, 7
        %v1758 = vsub.s32 %v1755, %v1757
        %v1759 = vrot.slane %v1751, %v1758
        %v1761 = vunpack.c.l.s4 1934713408
        %v1762 = vunpack.c.0.s8 %v1761
        %v1763 = vlaneseq
        %v1764 = vshrl.u32 %v1763, 7
        %v1765 = vsub.s32 %v1762, %v1764
        %v1766 = vrot.slane %v1752, %v1765
        %v1767 = vcombine.high %v1743, 0.0
        %v1768 = vcombine.high %v1750, 0.0
        %v1769 = vcombine.high %v1759, 0.0
        %v1770 = vcombine.high %v1766, 0.0
        %v1771 = vcombine.low %v1743, %v1750
        %v1773 = vunpack.c.l.s4 1983009808
        %v1774 = vunpack.c.0.s8 %v1773
        %v1775 = vlaneseq
        %v1776 = vshrl.u32 %v1775, 7
        %v1777 = vsub.s32 %v1774, %v1776
        %v1778 = vrot.slane %v1771, %v1777
        %v1779 = vcombine.low %v1767, %v1768
        %v1781 = vunpack.c.l.s4 1983009808
        %v1782 = vunpack.c.0.s8 %v1781
        %v1783 = vlaneseq
        %v1784 = vshrl.u32 %v1783, 7
        %v1785 = vsub.s32 %v1782, %v1784
        %v1786 = vrot.slane %v1779, %v1785
        %v1787 = vcombine.low %v1759, %v1766
        %v1789 = vunpack.c.l.s4 1983009808
        %v1790 = vunpack.c.0.s8 %v1789
        %v1791 = vlaneseq
        %v1792 = vshrl.u32 %v1791, 7
        %v1793 = vsub.s32 %v1790, %v1792
        %v1794 = vrot.slane %v1787, %v1793
        %v1795 = vcombine.low %v1769, %v1770
        %v1797 = vunpack.c.l.s4 1983009808
        %v1798 = vunpack.c.0.s8 %v1797
        %v1799 = vlaneseq
        %v1800 = vshrl.u32 %v1799, 7
        %v1801 = vsub.s32 %v1798, %v1800
        %v1802 = vrot.slane %v1795, %v1801
        %v1803 = vcombine.low %v1778, %v1786
        %v1804 = vcombine.high %v1778, %v1786
        %v1806 = vunpack.c.l.s4 1934713408
        %v1807 = vunpack.c.0.s8 %v1806
        %v1808 = vlaneseq
        %v1809 = vshrl.u32 %v1808, 7
        %v1810 = vsub.s32 %v1807, %v1809
        %v1811 = vrot.slane %v1803, %v1810
        %v1813 = vunpack.c.l.s4 1934713408
        %v1814 = vunpack.c.0.s8 %v1813
        %v1815 = vlaneseq
        %v1816 = vshrl.u32 %v1815, 7
        %v1817 = vsub.s32 %v1814, %v1816
        %v1818 = vrot.slane %v1804, %v1817
        %v1819 = vcombine.low %v1794, %v1802
        %v1820 = vcombine.high %v1794, %v1802
        %v1822 = vunpack.c.l.s4 1934713408
        %v1823 = vunpack.c.0.s8 %v1822
        %v1824 = vlaneseq
        %v1825 = vshrl.u32 %v1824, 7
        %v1826 = vsub.s32 %v1823, %v1825
        %v1827 = vrot.slane %v1819, %v1826
        %v1829 = vunpack.c.l.s4 1934713408
        %v1830 = vunpack.c.0.s8 %v1829
        %v1831 = vlaneseq
        %v1832 = vshrl.u32 %v1831, 7
        %v1833 = vsub.s32 %v1830, %v1832
        %v1834 = vrot.slane %v1820, %v1833
        %v1835 = vcombine.low %v1811, %v1827
        %v1836 = vcombine.high %v1811, %v1827
        %v1837 = vcombine.low %v1818, %v1834
        %v1838 = vcombine.high %v1818, %v1834
        %1840 = vrot.lane.b32.xlu0 %v1836, 8
        %v1841 = vpop.permute.xlu0 %1840
        %1844 = vrot.lane.b32.xlu0 %v1837, 16
        %v1845 = vpop.permute.xlu0 %1844
        %1848 = vrot.lane.b32.xlu0 %v1838, 24
        %v1849 = vpop.permute.xlu0 %1848
        %v1851 = vsel %vm1281, %v1835, %v1841
        %vm1852 = vcmask 130048
        %v1853 = vsel %vm1852, %v1851, %v1845
        %vm1854 = vcmask 195584
        %v1855 = vsel %vm1854, %v1853, %v1849
        %v1856 = vpack.c.bf16 %v1855, %v1855
        %v1857 = vld [vmem:[%s709] sm:$0xf]
        %v1858 = vld [vmem:[%s709 + $0x4] sm:$0xf]
        %v1859 = vld [vmem:[%s709 + $0x8] sm:$0xf]
        %v1860 = vld [vmem:[%s709 + $0xc] sm:$0xf]
        %v1861 = vld [vmem:[%s712] sm:$0x1]
        %v1863 = vlaneseq
        %v1864 = vshrl.u32 %v1863, 7
        %v1865 = vsub.s32 0, %v1864
        %v1866 = vrot.slane %v1861, %v1865
        %v1872 = vunpack.c.l.b16 %v1857
        %v1873 = vunpack.c.l.b16 %v1858
        %v1874 = vunpack.c.l.b16 %v1859
        %v1875 = vunpack.c.l.b16 %v1860
        %v1876 = vpack.c.b16 %v1873, %v1872
        %v1877 = vpack.c.b16 %v1875, %v1874
        %v1881 = vsel %vm783, %v1856, 0
        %1883 = vmatprep.subr.bf16.mxu0 0
        %1884 = vmatpush1.bf16.msra.mxu0 0
        %1885 = vmatprep.subr.bf16.mxu0 0
        %1886 = vmatpush1.bf16.msra.mxu0 0
        %1887 = vmatprep.subr.bf16.mxu0 0
        %1888 = vmatpush1.bf16.msra.mxu0 0
        %1889 = vmatprep.subr.bf16.mxu0 0
        %1890 = vmatpush1.bf16.msra.mxu0 0
        %1891 = vmatprep.subr.bf16.mxu0 0
        %1892 = vmatpush1.bf16.msra.mxu0 0
        %1893 = vmatprep.subr.bf16.mxu0 0
        %1894 = vmatpush1.bf16.msra.mxu0 0
        %1895 = vmatprep.subr.bf16.mxu0 0
        %1896 = vmatpush1.bf16.msra.mxu0 %v1877
        %1897 = vmatprep.subr.bf16.mxu0 0
        %1898 = vmatpush1.bf16.msra.mxu0 %v1876
        %1899 = vmatprep.subr.bf16.mxu0 0
        %1900 = vmatpush2.bf16.msra.mxu0 0
        %1901 = vmatprep.subr.bf16.mxu0 0
        %1902 = vmatpush2.bf16.msra.mxu0 0
        %1903 = vmatprep.subr.bf16.mxu0 0
        %1904 = vmatpush2.bf16.msra.mxu0 0
        %1905 = vmatprep.subr.bf16.mxu0 0
        %1906 = vmatpush2.bf16.msra.mxu0 0
        %1907 = vmatprep.subr.bf16.mxu0 0
        %1908 = vmatpush2.bf16.msra.mxu0 0
        %1909 = vmatprep.subr.bf16.mxu0 0
        %1910 = vmatpush2.bf16.msra.mxu0 0
        %1911 = vmatprep.subr.bf16.mxu0 0
        %1912 = vmatpush2.bf16.msra.mxu0 0
        %1913 = vmatprep.subr.bf16.mxu0 0
        %1914 = vmatpush2.bf16.msra.mxu0 0
        %1915 = vmatprep.mubr.bf16.mxu0 0
        %1916 = vmatmul.mubr.bf16.gmra.mxu0 %v1881
        %v1917 = vpop.f32.mrf.mxu0
        %v1918 = vadd.f32 %v1866, %v1917
        %v1919 = vpop.f32.mrf.mxu0
        %v1920 = vpop.f32.mrf.mxu0
        %v1921 = vpop.f32.mrf.mxu0
        %1922 = vdwg.mxu0
        %v1923 = vadd.f32 %v749, %v1918
        %v1924 = vld [vmem:[%s731] sm:$0x1]
        %v1925 = vld [vmem:[%s734] sm:$0x1]
        %v1926 = vsel %vm783, %v1923, 0.0
        %1927 = vadd.xlane.f32.xlu0 %v1926
        %v1928 = vpop.xlane.xlu0 %1927
        %v1929 = vrcp.pop 32.0
        %v1930 = vmul.f32 %v1928, %v1929
        %v1931 = vsub.f32 %v1923, %v1930
        %v1932 = vmul.f32 %v1931, %v1931
        %v1933 = vsel %vm783, %v1932, 0.0
        %1934 = vadd.xlane.f32.xlu0 %v1933
        %v1935 = vpop.xlane.xlu0 %1934
        %v1936 = vmul.f32 %v1935, %v1929
        %v1937 = vadd.f32 %v1936, 1e-05
        %v1938 = vrsqrt.pop %v1937
        %v1939 = vmul.f32 %v1931, %v1938
        %v1941 = vlaneseq
        %v1942 = vshrl.u32 %v1941, 7
        %v1943 = vsub.s32 0, %v1942
        %v1944 = vrot.slane %v1924, %v1943
        %v1946 = vmul.f32 %v1939, %v1944
        %v1948 = vlaneseq
        %v1949 = vshrl.u32 %v1948, 7
        %v1950 = vsub.s32 0, %v1949
        %v1951 = vrot.slane %v1925, %v1950
        %v1953 = vadd.f32 %v1946, %v1951
        %v1954 = vpack.c.bf16 %v1953, %v1953
        %v1955 = vld [vmem:[%s717] sm:$0xf]
        %v1956 = vld [vmem:[%s717 + $0x4] sm:$0xf]
        %v1957 = vld [vmem:[%s717 + $0x8] sm:$0xf]
        %v1958 = vld [vmem:[%s717 + $0xc] sm:$0xf]
        %v1959 = vld [vmem:[%s720] sm:$0x1]
        %v1961 = vlaneseq
        %v1962 = vshrl.u32 %v1961, 7
        %v1963 = vsub.s32 0, %v1962
        %v1964 = vrot.slane %v1959, %v1963
        %v1970 = vunpack.c.l.b16 %v1955
        %v1971 = vunpack.c.l.b16 %v1956
        %v1972 = vunpack.c.l.b16 %v1957
        %v1973 = vunpack.c.l.b16 %v1958
        %v1974 = vpack.c.b16 %v1971, %v1970
        %v1975 = vpack.c.b16 %v1973, %v1972
        %v1979 = vsel %vm783, %v1954, 0
        %1981 = vmatprep.subr.bf16.mxu0 0
        %1982 = vmatpush1.bf16.msra.mxu0 0
        %1983 = vmatprep.subr.bf16.mxu0 0
        %1984 = vmatpush1.bf16.msra.mxu0 0
        %1985 = vmatprep.subr.bf16.mxu0 0
        %1986 = vmatpush1.bf16.msra.mxu0 0
        %1987 = vmatprep.subr.bf16.mxu0 0
        %1988 = vmatpush1.bf16.msra.mxu0 0
        %1989 = vmatprep.subr.bf16.mxu0 0
        %1990 = vmatpush1.bf16.msra.mxu0 0
        %1991 = vmatprep.subr.bf16.mxu0 0
        %1992 = vmatpush1.bf16.msra.mxu0 0
        %1993 = vmatprep.subr.bf16.mxu0 0
        %1994 = vmatpush1.bf16.msra.mxu0 %v1975
        %1995 = vmatprep.subr.bf16.mxu0 0
        %1996 = vmatpush1.bf16.msra.mxu0 %v1974
        %1997 = vmatprep.subr.bf16.mxu0 0
        %1998 = vmatpush2.bf16.msra.mxu0 0
        %1999 = vmatprep.subr.bf16.mxu0 0
        %2000 = vmatpush2.bf16.msra.mxu0 0
        %2001 = vmatprep.subr.bf16.mxu0 0
        %2002 = vmatpush2.bf16.msra.mxu0 0
        %2003 = vmatprep.subr.bf16.mxu0 0
        %2004 = vmatpush2.bf16.msra.mxu0 0
        %2005 = vmatprep.subr.bf16.mxu0 0
        %2006 = vmatpush2.bf16.msra.mxu0 0
        %2007 = vmatprep.subr.bf16.mxu0 0
        %2008 = vmatpush2.bf16.msra.mxu0 0
        %2009 = vmatprep.subr.bf16.mxu0 0
        %2010 = vmatpush2.bf16.msra.mxu0 0
        %2011 = vmatprep.subr.bf16.mxu0 0
        %2012 = vmatpush2.bf16.msra.mxu0 0
        %2013 = vmatprep.mubr.bf16.mxu0 0
        %2014 = vmatmul.mubr.bf16.gmra.mxu0 %v1979
        %v2015 = vpop.f32.mrf.mxu0
        %v2016 = vadd.f32 %v1964, %v2015
        %v2017 = vpop.f32.mrf.mxu0
        %v2018 = vpop.f32.mrf.mxu0
        %v2019 = vpop.f32.mrf.mxu0
        %2020 = vdwg.mxu0
        %v2021 = vmax.f32 %v2016, 0.0
        %v2022 = vpack.c.bf16 %v2021, %v2021
        %v2023 = vld [vmem:[%s725] sm:$0xf]
        %v2024 = vld [vmem:[%s725 + $0x4] sm:$0xf]
        %v2025 = vld [vmem:[%s725 + $0x8] sm:$0xf]
        %v2026 = vld [vmem:[%s725 + $0xc] sm:$0xf]
        %v2027 = vld [vmem:[%s725 + $0x10] sm:$0xf]
        %v2028 = vld [vmem:[%s725 + $0x14] sm:$0xf]
        %v2029 = vld [vmem:[%s725 + $0x18] sm:$0xf]
        %v2030 = vld [vmem:[%s725 + $0x1c] sm:$0xf]
        %v2031 = vld [vmem:[%s728] sm:$0x1]
        %v2033 = vlaneseq
        %v2034 = vshrl.u32 %v2033, 7
        %v2035 = vsub.s32 0, %v2034
        %v2036 = vrot.slane %v2031, %v2035
        %v2046 = vunpack.c.l.b16 %v2023
        %v2047 = vunpack.c.l.b16 %v2024
        %v2048 = vunpack.c.l.b16 %v2025
        %v2049 = vunpack.c.l.b16 %v2026
        %v2050 = vunpack.c.l.b16 %v2027
        %v2051 = vunpack.c.l.b16 %v2028
        %v2052 = vunpack.c.l.b16 %v2029
        %v2053 = vunpack.c.l.b16 %v2030
        %v2054 = vpack.c.b16 %v2047, %v2046
        %v2055 = vpack.c.b16 %v2049, %v2048
        %v2056 = vpack.c.b16 %v2051, %v2050
        %v2057 = vpack.c.b16 %v2053, %v2052
        %vm2062 = vcmask 523264
        %v2064 = vsel %vm2062, %v2022, 0
        %2066 = vmatprep.subr.bf16.mxu0 0
        %2067 = vmatpush1.bf16.msra.mxu0 0
        %2068 = vmatprep.subr.bf16.mxu0 0
        %2069 = vmatpush1.bf16.msra.mxu0 0
        %2070 = vmatprep.subr.bf16.mxu0 0
        %2071 = vmatpush1.bf16.msra.mxu0 0
        %2072 = vmatprep.subr.bf16.mxu0 0
        %2073 = vmatpush1.bf16.msra.mxu0 0
        %2074 = vmatprep.subr.bf16.mxu0 0
        %2075 = vmatpush1.bf16.msra.mxu0 %v2057
        %2076 = vmatprep.subr.bf16.mxu0 0
        %2077 = vmatpush1.bf16.msra.mxu0 %v2056
        %2078 = vmatprep.subr.bf16.mxu0 0
        %2079 = vmatpush1.bf16.msra.mxu0 %v2055
        %2080 = vmatprep.subr.bf16.mxu0 0
        %2081 = vmatpush1.bf16.msra.mxu0 %v2054
        %2082 = vmatprep.subr.bf16.mxu0 0
        %2083 = vmatpush2.bf16.msra.mxu0 0
        %2084 = vmatprep.subr.bf16.mxu0 0
        %2085 = vmatpush2.bf16.msra.mxu0 0
        %2086 = vmatprep.subr.bf16.mxu0 0
        %2087 = vmatpush2.bf16.msra.mxu0 0
        %2088 = vmatprep.subr.bf16.mxu0 0
        %2089 = vmatpush2.bf16.msra.mxu0 0
        %2090 = vmatprep.subr.bf16.mxu0 0
        %2091 = vmatpush2.bf16.msra.mxu0 0
        %2092 = vmatprep.subr.bf16.mxu0 0
        %2093 = vmatpush2.bf16.msra.mxu0 0
        %2094 = vmatprep.subr.bf16.mxu0 0
        %2095 = vmatpush2.bf16.msra.mxu0 0
        %2096 = vmatprep.subr.bf16.mxu0 0
        %2097 = vmatpush2.bf16.msra.mxu0 0
        %2098 = vmatprep.mubr.bf16.mxu0 0
        %2099 = vmatmul.mubr.bf16.gmra.mxu0 %v2064
        %v2100 = vpop.f32.mrf.mxu0
        %v2101 = vadd.f32 %v2036, %v2100
        %v2102 = vpop.f32.mrf.mxu0
        %v2103 = vpop.f32.mrf.mxu0
        %v2104 = vpop.f32.mrf.mxu0
        %2105 = vdwg.mxu0
        %v2106 = vadd.f32 %v1953, %v2101
        %v2107 = vld [vmem:[%s737] sm:$0x1]
        %v2108 = vld [vmem:[%s740] sm:$0x1]
        %v2109 = vsel %vm783, %v2106, 0.0
        %2110 = vadd.xlane.f32.xlu0 %v2109
        %v2111 = vpop.xlane.xlu0 %2110
        %v2112 = vmul.f32 %v2111, %v1929
        %v2113 = vsub.f32 %v2106, %v2112
        %v2114 = vmul.f32 %v2113, %v2113
        %v2115 = vsel %vm783, %v2114, 0.0
        %2116 = vadd.xlane.f32.xlu0 %v2115
        %v2117 = vpop.xlane.xlu0 %2116
        %v2118 = vmul.f32 %v2117, %v1929
        %v2119 = vadd.f32 %v2118, 1e-05
        %v2120 = vrsqrt.pop %v2119
        %v2121 = vmul.f32 %v2113, %v2120
        %v2123 = vlaneseq
        %v2124 = vshrl.u32 %v2123, 7
        %v2125 = vsub.s32 0, %v2124
        %v2126 = vrot.slane %v2107, %v2125
        %v2128 = vmul.f32 %v2121, %v2126
        %v2130 = vlaneseq
        %v2131 = vshrl.u32 %v2130, 7
        %v2132 = vsub.s32 0, %v2131
        %v2133 = vrot.slane %v2108, %v2132
        %v2135 = vadd.f32 %v2128, %v2133
        %2136 = vst.msk [vmem:[%s693] sm:$0xff] %vm783, %v2135
        %s2137 = sand.u32 %s438, 1
        %s2138 = scalar_lea.sflag [#allocation4], %s2137
        %s2139 = sand.u32 %s438, 1
        %s2140 = smul.addr %s2139, 8
        %s2141 = scalar_lea.vmem [#allocation7], %s2140
        // Predicated region
        $region93: #{tpu_custom_call.1} parent=79 // pred_check
          %p2142 = pneg %p448
        $region94: #{tpu_custom_call.1} parent=79 // pred_check_branch
          %2144 = sbr.rel (%p2142) target = $region96
        $region95: #{tpu_custom_call.1} parent=79 // pred_region
          %s2146 = ssub.s32 128, 128
          %2147 = vsyncadd %s2138, %s2146
          %s2148 = smul.addr %s37, 128
          %s2149 = scalar_lea.hbm %s15, %s2148
          %s2151 = sshll.u32 %s2141, 4
          %s2152 = int_to_ptr.vmem [resolvable:$true] %s2151
          %2154 = dma.vmem_to_hbm [thread:$0]  %s2152, 128, %s2149, %s2138
        $region96: #{tpu_custom_call.1} parent=79 // pred_fallthru
          _
      $region80: #{tpu_custom_call.1} parent=5 // pred_fallthru
        _
      %p2155 = scmp.le.s32.totalorder 2, %s28
      // Predicated region
      $region97: #{tpu_custom_call.1} parent=5 // pred_check
        %p2156 = pneg %p2155
      $region98: #{tpu_custom_call.1} parent=5 // pred_check_branch
        %2158 = sbr.rel (%p2156) target = $region100
      $region99: #{tpu_custom_call.1} parent=5 // pred_region
        %s2159 = ssub.s32 %s28, 2
        // Predicated region
        $region101: #{tpu_custom_call.1} parent=99 // pred_check
          %p2160 = pneg %p454
        $region102: #{tpu_custom_call.1} parent=99 // pred_check_branch
          %2162 = sbr.rel (%p2160) target = $region104
        $region103: #{tpu_custom_call.1} parent=99 // pred_region
          %s2163 = sand.u32 %s439, 1
          %s2164 = scalar_lea.sflag [#allocation4], %s2163
          %s2165 = sand.u32 %s439, 1
          %s2166 = smul.addr %s2165, 8
          %s2167 = scalar_lea.vmem [#allocation7], %s2166
          %2168 = dma.done %s2164, 128
        $region104: #{tpu_custom_call.1} parent=99 // pred_fallthru
          _
      $region100: #{tpu_custom_call.1} parent=5 // pred_fallthru
        _
    $region6: #{tpu_custom_call.1} parent=1 // loop_footer
      %s32 = sadd.s32 1, %s28
    $region7: #{tpu_custom_call.1} parent=1 // loop_footer_branch
      %27 = sbr.rel target = $region3
    $region8: #{tpu_custom_call.1} parent=1 // loop_exit
      _
    %2169 = vsyncpa [#allocation3], 1
    %s2170 = scalar_lea.sflag [#allocation3], 1
    %2171 = vsyncpa %s2170, 1
    %2172 = vsyncpa [#allocation6], 1
    %2173 = vsyncpa [#allocation4], 1
    %s2174 = scalar_lea.sflag [#allocation4], 1
    %2175 = vsyncpa %s2174, 1

</llo_original>
